<compile_context>
chip_gen: v5e
topology: v5e:2x2
jax: 0.10.0
libtpu: 0.0.40
codegen_flags: <defaults>
</compile_context>

<pallas_src>
import jax
import jax.numpy as jnp
from jax import lax
from jax.experimental import pallas as pl
from jax.experimental.pallas import tpu as pltpu


# ----------------------------------------------------------------------------
# Fused Pallas kernel: online encoder + predictor + target encoder + BYOL loss
# ----------------------------------------------------------------------------
def _byol_fused_kernel(f1_ref, f2_ref,
                       ew1_ref, eb1_ref, ew2_ref, eb2_ref,
                       tw1_ref, tb1_ref, tw2_ref, tb2_ref,
                       pw1_ref, pb1_ref, pw2_ref, pb2_ref,
                       o_ref):
    """o[0,0] = mean_i[ loss_one_i + loss_two_i ]  (the module's loss.mean()).

    f1 : [B, D] bf16  flattened view 1
    f2 : [B, D] bf16  flattened view 2
    """

    def mlp2(x_bf16, w1_ref, b1_ref, w2_ref, b2_ref):
        # relu(x @ W1 + b1) @ W2 + b2 ; bf16 MXU operands, f32 accumulation,
        # bias/ReLU kept in f32 (no bf16 VPU on v5e).
        h = jnp.dot(x_bf16, w1_ref[...], preferred_element_type=jnp.float32)
        h = jnp.maximum(h + b1_ref[...], 0.0)
        o = jnp.dot(h.astype(w2_ref.dtype), w2_ref[...],
                    preferred_element_type=jnp.float32)
        return o + b2_ref[...]

    f1 = f1_ref[...]                                           # [B, D] bf16
    f2 = f2_ref[...]                                           # [B, D] bf16

    # online encoder -> predictor, per view
    proj1 = mlp2(f1, ew1_ref, eb1_ref, ew2_ref, eb2_ref)        # [B, P] f32
    proj2 = mlp2(f2, ew1_ref, eb1_ref, ew2_ref, eb2_ref)        # [B, P] f32
    pred1 = mlp2(proj1.astype(pw1_ref.dtype),
                 pw1_ref, pb1_ref, pw2_ref, pb2_ref)            # [B, P] f32
    pred2 = mlp2(proj2.astype(pw1_ref.dtype),
                 pw1_ref, pb1_ref, pw2_ref, pb2_ref)            # [B, P] f32

    # target encoder (stop-gradient deepcopy of the online encoder) on the SAME
    # two views — no view-swapped input array; the cross-view pairing happens
    # below with zero data movement.
    tgt1 = mlp2(f1, tw1_ref, tb1_ref, tw2_ref, tb2_ref)         # [B, P] f32
    tgt2 = mlp2(f2, tw1_ref, tb1_ref, tw2_ref, tb2_ref)         # [B, P] f32

    # symmetric BYOL loss, fused-cosine epilogue (EUP rsqrt, no divides).
    # eps^2 guard <=> reference's max(||v||, 1e-12).
    eps2 = jnp.float32(1e-24)

    def row_cos(a, b):
        ab = jnp.sum(a * b, axis=-1, keepdims=True)             # [B, 1]
        aa = jnp.sum(a * a, axis=-1, keepdims=True)
        bb = jnp.sum(b * b, axis=-1, keepdims=True)
        return (ab
                * lax.rsqrt(jnp.maximum(aa, eps2))
                * lax.rsqrt(jnp.maximum(bb, eps2)))

    b_rows = f1_ref.shape[0]
    sims = jnp.sum(row_cos(pred1, tgt2)) + jnp.sum(row_cos(pred2, tgt1))
    # mean_i[(2 - 2*sim1_i) + (2 - 2*sim2_i)] = 4 - (2/B) * sum(all row sims)
    loss = 4.0 - (2.0 / b_rows) * sims
    o_ref[...] = jnp.full(o_ref.shape, loss, o_ref.dtype)


def _vmem_spec():
    return pl.BlockSpec(memory_space=pltpu.MemorySpace.VMEM)


# ----------------------------------------------------------------------------
# BYOL forward (matches BYOL.forward -> loss.mean())
# ----------------------------------------------------------------------------
def augment_fn(x):
    # deterministic two-view "augmentation"
    aug_one = jnp.flip(x, axis=-1)   # horizontal flip
    aug_two = jnp.flip(x, axis=-2)   # vertical flip
    return aug_one, aug_two


def byol_forward(x, params):
    B = x.shape[0]
    aug_one, aug_two = augment_fn(x)
    # TODO(synk): the flips (lax.rev) stay as XLA glue; moving the W-axis
    # reversal into the kernel as a lane permute would remove the last HBM
    # round-trip of the inputs.
    f1 = aug_one.reshape(B, -1).astype(jnp.bfloat16)
    f2 = aug_two.reshape(B, -1).astype(jnp.bfloat16)

    ew1, eb1, ew2, eb2 = params["online_enc"]
    pw1, pb1, pw2, pb2 = params["predictor"]
    # torch.no_grad() / detach() semantics for the target branch
    tw1, tb1, tw2, tb2 = [jax.lax.stop_gradient(p) for p in params["target_enc"]]

    bf = jnp.bfloat16
    args = (
        f1, f2,
        ew1.astype(bf), eb1, ew2.astype(bf), eb2,   # online encoder
        tw1.astype(bf), tb1, tw2.astype(bf), tb2,   # target encoder
        pw1.astype(bf), pb1, pw2.astype(bf), pb2,   # predictor
    )
    loss = pl.pallas_call(
        _byol_fused_kernel,
        out_shape=jax.ShapeDtypeStruct((1, 1), jnp.float32),
        in_specs=[_vmem_spec() for _ in args],
        out_specs=_vmem_spec(),
    )(*args)
    return loss[0, 0]


# ----------------------------------------------------------------------------
# Deterministic parameter init (params kept in f32, like the torch module)
# ----------------------------------------------------------------------------
def init_params(key, d_in, d_hidden, d_proj):
    ks = jax.random.split(key, 8)

    def linear(kw, fan_in, fan_out):
        w = jax.random.normal(kw, (fan_in, fan_out), jnp.float32) / jnp.sqrt(fan_in)
        b = jnp.zeros((1, fan_out), jnp.float32)
        return w, b

    ew1, eb1 = linear(ks[0], d_in, d_hidden)
    ew2, eb2 = linear(ks[1], d_hidden, d_proj)
    pw1, pb1 = linear(ks[2], d_proj, d_hidden)
    pw2, pb2 = linear(ks[3], d_hidden, d_proj)

    online_enc = (ew1, eb1, ew2, eb2)
    target_enc = tuple(jnp.array(p) for p in online_enc)  # deepcopy semantics
    predictor = (pw1, pb1, pw2, pb2)
    return {"online_enc": online_enc, "target_enc": target_enc,
            "predictor": predictor}


# ----------------------------------------------------------------------------
# Pure-JAX reference (mirrors the kernel's bf16-operand / f32-accum matmuls)
# ----------------------------------------------------------------------------
def _reference(x, params):
    hp = jax.lax.Precision.HIGHEST

    def c(v):
        return v.astype(jnp.bfloat16).astype(jnp.float32)

    def mlp(v, w1, b1, w2, b2):
        h = jnp.maximum(jnp.dot(c(v), c(w1), precision=hp) + b1, 0.0)
        return jnp.dot(c(h), c(w2), precision=hp) + b2

    def norm(v):
        return v / jnp.maximum(jnp.linalg.norm(v, axis=-1, keepdims=True), 1e-12)

    B = x.shape[0]
    a1, a2 = augment_fn(x)
    f1, f2 = a1.reshape(B, -1), a2.reshape(B, -1)
    op1, op2 = mlp(f1, *params["online_enc"]), mlp(f2, *params["online_enc"])
    pp1, pp2 = mlp(op1, *params["predictor"]), mlp(op2, *params["predictor"])
    tp1, tp2 = mlp(f1, *params["target_enc"]), mlp(f2, *params["target_enc"])
    l1 = 2.0 - 2.0 * jnp.sum(norm(pp1) * norm(tp2), axis=-1)
    l2 = 2.0 - 2.0 * jnp.sum(norm(pp2) * norm(tp1), axis=-1)
    return jnp.mean(l1 + l2)


if __name__ == "__main__":
    B, C, H, W = 2, 4, 16, 16
    D_IN = C * H * W          # 1024
    D_HID = 128
    D_PROJ = 128

    key = jax.random.PRNGKey(0)
    kx, kp = jax.random.split(key)
    x = jax.random.normal(kx, (B, C, H, W), jnp.float32)
    params = init_params(kp, D_IN, D_HID, D_PROJ)

    loss = jax.jit(byol_forward)(x, params)
    loss = jax.block_until_ready(loss)

    ref = _reference(x, params)
    assert jnp.allclose(loss, ref, atol=1e-3, rtol=1e-3), (loss, ref)

    print("KERNEL_OK")
</pallas_src>

<mosaic_0001>
module attributes {stable_mosaic.version = 11 : i64} {
  func.func @_byol_fused_kernel(%arg0: memref<2x1024xbf16, #tpu.memory_space<vmem>>, %arg1: memref<2x1024xbf16, #tpu.memory_space<vmem>>, %arg2: memref<1024x128xbf16, #tpu.memory_space<vmem>>, %arg3: memref<1x128xf32, #tpu.memory_space<vmem>>, %arg4: memref<128x128xbf16, #tpu.memory_space<vmem>>, %arg5: memref<1x128xf32, #tpu.memory_space<vmem>>, %arg6: memref<1024x128xbf16, #tpu.memory_space<vmem>>, %arg7: memref<1x128xf32, #tpu.memory_space<vmem>>, %arg8: memref<128x128xbf16, #tpu.memory_space<vmem>>, %arg9: memref<1x128xf32, #tpu.memory_space<vmem>>, %arg10: memref<128x128xbf16, #tpu.memory_space<vmem>>, %arg11: memref<1x128xf32, #tpu.memory_space<vmem>>, %arg12: memref<128x128xbf16, #tpu.memory_space<vmem>>, %arg13: memref<1x128xf32, #tpu.memory_space<vmem>>, %arg14: memref<1x1xf32, #tpu.memory_space<vmem>>) attributes {dimension_semantics = [], scalar_prefetch = 0 : i64, scratch_operands = 0 : i64, tpu.core_type = #tpu.core_type<tc>} {
    %c0 = arith.constant 0 : index
    %c0_0 = arith.constant 0 : index
    %0 = vector.load %arg0[%c0, %c0_0] : memref<2x1024xbf16, #tpu.memory_space<vmem>>, vector<2x1024xbf16>
    %c0_1 = arith.constant 0 : index
    %c0_2 = arith.constant 0 : index
    %1 = vector.load %arg1[%c0_1, %c0_2] : memref<2x1024xbf16, #tpu.memory_space<vmem>>, vector<2x1024xbf16>
    %c0_3 = arith.constant 0 : index
    %c0_4 = arith.constant 0 : index
    %2 = vector.load %arg2[%c0_3, %c0_4] : memref<1024x128xbf16, #tpu.memory_space<vmem>>, vector<1024x128xbf16>
    %cst = arith.constant dense<0.000000e+00> : vector<2x128xf32>
    %3 = tpu.matmul %0, %2, %cst {dimension_numbers = #tpu.dot_dimension_numbers<[1], [0], [0], [1], [0, 0, 1, 1], [], []>} : vector<2x1024xbf16>, vector<1024x128xbf16>, vector<2x128xf32> -> vector<2x128xf32>
    %c0_5 = arith.constant 0 : index
    %c0_6 = arith.constant 0 : index
    %4 = vector.load %arg3[%c0_5, %c0_6] : memref<1x128xf32, #tpu.memory_space<vmem>>, vector<1x128xf32>
    %5 = vector.broadcast %4 : vector<1x128xf32> to vector<2x128xf32>
    %6 = arith.addf %3, %5 : vector<2x128xf32>
    %cst_7 = arith.constant 0.000000e+00 : f32
    %7 = vector.broadcast %cst_7 : f32 to vector<2x128xf32>
    %8 = arith.maximumf %6, %7 : vector<2x128xf32>
    %9 = arith.truncf %8 : vector<2x128xf32> to vector<2x128xbf16>
    %c0_8 = arith.constant 0 : index
    %c0_9 = arith.constant 0 : index
    %10 = vector.load %arg4[%c0_8, %c0_9] : memref<128x128xbf16, #tpu.memory_space<vmem>>, vector<128x128xbf16>
    %cst_10 = arith.constant dense<0.000000e+00> : vector<2x128xf32>
    %11 = tpu.matmul %9, %10, %cst_10 {dimension_numbers = #tpu.dot_dimension_numbers<[1], [0], [0], [1], [0, 0, 1, 1], [], []>} : vector<2x128xbf16>, vector<128x128xbf16>, vector<2x128xf32> -> vector<2x128xf32>
    %c0_11 = arith.constant 0 : index
    %c0_12 = arith.constant 0 : index
    %12 = vector.load %arg5[%c0_11, %c0_12] : memref<1x128xf32, #tpu.memory_space<vmem>>, vector<1x128xf32>
    %13 = vector.broadcast %12 : vector<1x128xf32> to vector<2x128xf32>
    %14 = arith.addf %11, %13 : vector<2x128xf32>
    %c0_13 = arith.constant 0 : index
    %c0_14 = arith.constant 0 : index
    %15 = vector.load %arg2[%c0_13, %c0_14] : memref<1024x128xbf16, #tpu.memory_space<vmem>>, vector<1024x128xbf16>
    %cst_15 = arith.constant dense<0.000000e+00> : vector<2x128xf32>
    %16 = tpu.matmul %1, %15, %cst_15 {dimension_numbers = #tpu.dot_dimension_numbers<[1], [0], [0], [1], [0, 0, 1, 1], [], []>} : vector<2x1024xbf16>, vector<1024x128xbf16>, vector<2x128xf32> -> vector<2x128xf32>
    %c0_16 = arith.constant 0 : index
    %c0_17 = arith.constant 0 : index
    %17 = vector.load %arg3[%c0_16, %c0_17] : memref<1x128xf32, #tpu.memory_space<vmem>>, vector<1x128xf32>
    %18 = vector.broadcast %17 : vector<1x128xf32> to vector<2x128xf32>
    %19 = arith.addf %16, %18 : vector<2x128xf32>
    %cst_18 = arith.constant 0.000000e+00 : f32
    %20 = vector.broadcast %cst_18 : f32 to vector<2x128xf32>
    %21 = arith.maximumf %19, %20 : vector<2x128xf32>
    %22 = arith.truncf %21 : vector<2x128xf32> to vector<2x128xbf16>
    %c0_19 = arith.constant 0 : index
    %c0_20 = arith.constant 0 : index
    %23 = vector.load %arg4[%c0_19, %c0_20] : memref<128x128xbf16, #tpu.memory_space<vmem>>, vector<128x128xbf16>
    %cst_21 = arith.constant dense<0.000000e+00> : vector<2x128xf32>
    %24 = tpu.matmul %22, %23, %cst_21 {dimension_numbers = #tpu.dot_dimension_numbers<[1], [0], [0], [1], [0, 0, 1, 1], [], []>} : vector<2x128xbf16>, vector<128x128xbf16>, vector<2x128xf32> -> vector<2x128xf32>
    %c0_22 = arith.constant 0 : index
    %c0_23 = arith.constant 0 : index
    %25 = vector.load %arg5[%c0_22, %c0_23] : memref<1x128xf32, #tpu.memory_space<vmem>>, vector<1x128xf32>
    %26 = vector.broadcast %25 : vector<1x128xf32> to vector<2x128xf32>
    %27 = arith.addf %24, %26 : vector<2x128xf32>
    %28 = arith.truncf %14 : vector<2x128xf32> to vector<2x128xbf16>
    %c0_24 = arith.constant 0 : index
    %c0_25 = arith.constant 0 : index
    %29 = vector.load %arg10[%c0_24, %c0_25] : memref<128x128xbf16, #tpu.memory_space<vmem>>, vector<128x128xbf16>
    %cst_26 = arith.constant dense<0.000000e+00> : vector<2x128xf32>
    %30 = tpu.matmul %28, %29, %cst_26 {dimension_numbers = #tpu.dot_dimension_numbers<[1], [0], [0], [1], [0, 0, 1, 1], [], []>} : vector<2x128xbf16>, vector<128x128xbf16>, vector<2x128xf32> -> vector<2x128xf32>
    %c0_27 = arith.constant 0 : index
    %c0_28 = arith.constant 0 : index
    %31 = vector.load %arg11[%c0_27, %c0_28] : memref<1x128xf32, #tpu.memory_space<vmem>>, vector<1x128xf32>
    %32 = vector.broadcast %31 : vector<1x128xf32> to vector<2x128xf32>
    %33 = arith.addf %30, %32 : vector<2x128xf32>
    %cst_29 = arith.constant 0.000000e+00 : f32
    %34 = vector.broadcast %cst_29 : f32 to vector<2x128xf32>
    %35 = arith.maximumf %33, %34 : vector<2x128xf32>
    %36 = arith.truncf %35 : vector<2x128xf32> to vector<2x128xbf16>
    %c0_30 = arith.constant 0 : index
    %c0_31 = arith.constant 0 : index
    %37 = vector.load %arg12[%c0_30, %c0_31] : memref<128x128xbf16, #tpu.memory_space<vmem>>, vector<128x128xbf16>
    %cst_32 = arith.constant dense<0.000000e+00> : vector<2x128xf32>
    %38 = tpu.matmul %36, %37, %cst_32 {dimension_numbers = #tpu.dot_dimension_numbers<[1], [0], [0], [1], [0, 0, 1, 1], [], []>} : vector<2x128xbf16>, vector<128x128xbf16>, vector<2x128xf32> -> vector<2x128xf32>
    %c0_33 = arith.constant 0 : index
    %c0_34 = arith.constant 0 : index
    %39 = vector.load %arg13[%c0_33, %c0_34] : memref<1x128xf32, #tpu.memory_space<vmem>>, vector<1x128xf32>
    %40 = vector.broadcast %39 : vector<1x128xf32> to vector<2x128xf32>
    %41 = arith.addf %38, %40 : vector<2x128xf32>
    %42 = arith.truncf %27 : vector<2x128xf32> to vector<2x128xbf16>
    %c0_35 = arith.constant 0 : index
    %c0_36 = arith.constant 0 : index
    %43 = vector.load %arg10[%c0_35, %c0_36] : memref<128x128xbf16, #tpu.memory_space<vmem>>, vector<128x128xbf16>
    %cst_37 = arith.constant dense<0.000000e+00> : vector<2x128xf32>
    %44 = tpu.matmul %42, %43, %cst_37 {dimension_numbers = #tpu.dot_dimension_numbers<[1], [0], [0], [1], [0, 0, 1, 1], [], []>} : vector<2x128xbf16>, vector<128x128xbf16>, vector<2x128xf32> -> vector<2x128xf32>
    %c0_38 = arith.constant 0 : index
    %c0_39 = arith.constant 0 : index
    %45 = vector.load %arg11[%c0_38, %c0_39] : memref<1x128xf32, #tpu.memory_space<vmem>>, vector<1x128xf32>
    %46 = vector.broadcast %45 : vector<1x128xf32> to vector<2x128xf32>
    %47 = arith.addf %44, %46 : vector<2x128xf32>
    %cst_40 = arith.constant 0.000000e+00 : f32
    %48 = vector.broadcast %cst_40 : f32 to vector<2x128xf32>
    %49 = arith.maximumf %47, %48 : vector<2x128xf32>
    %50 = arith.truncf %49 : vector<2x128xf32> to vector<2x128xbf16>
    %c0_41 = arith.constant 0 : index
    %c0_42 = arith.constant 0 : index
    %51 = vector.load %arg12[%c0_41, %c0_42] : memref<128x128xbf16, #tpu.memory_space<vmem>>, vector<128x128xbf16>
    %cst_43 = arith.constant dense<0.000000e+00> : vector<2x128xf32>
    %52 = tpu.matmul %50, %51, %cst_43 {dimension_numbers = #tpu.dot_dimension_numbers<[1], [0], [0], [1], [0, 0, 1, 1], [], []>} : vector<2x128xbf16>, vector<128x128xbf16>, vector<2x128xf32> -> vector<2x128xf32>
    %c0_44 = arith.constant 0 : index
    %c0_45 = arith.constant 0 : index
    %53 = vector.load %arg13[%c0_44, %c0_45] : memref<1x128xf32, #tpu.memory_space<vmem>>, vector<1x128xf32>
    %54 = vector.broadcast %53 : vector<1x128xf32> to vector<2x128xf32>
    %55 = arith.addf %52, %54 : vector<2x128xf32>
    %c0_46 = arith.constant 0 : index
    %c0_47 = arith.constant 0 : index
    %56 = vector.load %arg6[%c0_46, %c0_47] : memref<1024x128xbf16, #tpu.memory_space<vmem>>, vector<1024x128xbf16>
    %cst_48 = arith.constant dense<0.000000e+00> : vector<2x128xf32>
    %57 = tpu.matmul %0, %56, %cst_48 {dimension_numbers = #tpu.dot_dimension_numbers<[1], [0], [0], [1], [0, 0, 1, 1], [], []>} : vector<2x1024xbf16>, vector<1024x128xbf16>, vector<2x128xf32> -> vector<2x128xf32>
    %c0_49 = arith.constant 0 : index
    %c0_50 = arith.constant 0 : index
    %58 = vector.load %arg7[%c0_49, %c0_50] : memref<1x128xf32, #tpu.memory_space<vmem>>, vector<1x128xf32>
    %59 = vector.broadcast %58 : vector<1x128xf32> to vector<2x128xf32>
    %60 = arith.addf %57, %59 : vector<2x128xf32>
    %cst_51 = arith.constant 0.000000e+00 : f32
    %61 = vector.broadcast %cst_51 : f32 to vector<2x128xf32>
    %62 = arith.maximumf %60, %61 : vector<2x128xf32>
    %63 = arith.truncf %62 : vector<2x128xf32> to vector<2x128xbf16>
    %c0_52 = arith.constant 0 : index
    %c0_53 = arith.constant 0 : index
    %64 = vector.load %arg8[%c0_52, %c0_53] : memref<128x128xbf16, #tpu.memory_space<vmem>>, vector<128x128xbf16>
    %cst_54 = arith.constant dense<0.000000e+00> : vector<2x128xf32>
    %65 = tpu.matmul %63, %64, %cst_54 {dimension_numbers = #tpu.dot_dimension_numbers<[1], [0], [0], [1], [0, 0, 1, 1], [], []>} : vector<2x128xbf16>, vector<128x128xbf16>, vector<2x128xf32> -> vector<2x128xf32>
    %c0_55 = arith.constant 0 : index
    %c0_56 = arith.constant 0 : index
    %66 = vector.load %arg9[%c0_55, %c0_56] : memref<1x128xf32, #tpu.memory_space<vmem>>, vector<1x128xf32>
    %67 = vector.broadcast %66 : vector<1x128xf32> to vector<2x128xf32>
    %68 = arith.addf %65, %67 : vector<2x128xf32>
    %c0_57 = arith.constant 0 : index
    %c0_58 = arith.constant 0 : index
    %69 = vector.load %arg6[%c0_57, %c0_58] : memref<1024x128xbf16, #tpu.memory_space<vmem>>, vector<1024x128xbf16>
    %cst_59 = arith.constant dense<0.000000e+00> : vector<2x128xf32>
    %70 = tpu.matmul %1, %69, %cst_59 {dimension_numbers = #tpu.dot_dimension_numbers<[1], [0], [0], [1], [0, 0, 1, 1], [], []>} : vector<2x1024xbf16>, vector<1024x128xbf16>, vector<2x128xf32> -> vector<2x128xf32>
    %c0_60 = arith.constant 0 : index
    %c0_61 = arith.constant 0 : index
    %71 = vector.load %arg7[%c0_60, %c0_61] : memref<1x128xf32, #tpu.memory_space<vmem>>, vector<1x128xf32>
    %72 = vector.broadcast %71 : vector<1x128xf32> to vector<2x128xf32>
    %73 = arith.addf %70, %72 : vector<2x128xf32>
    %cst_62 = arith.constant 0.000000e+00 : f32
    %74 = vector.broadcast %cst_62 : f32 to vector<2x128xf32>
    %75 = arith.maximumf %73, %74 : vector<2x128xf32>
    %76 = arith.truncf %75 : vector<2x128xf32> to vector<2x128xbf16>
    %c0_63 = arith.constant 0 : index
    %c0_64 = arith.constant 0 : index
    %77 = vector.load %arg8[%c0_63, %c0_64] : memref<128x128xbf16, #tpu.memory_space<vmem>>, vector<128x128xbf16>
    %cst_65 = arith.constant dense<0.000000e+00> : vector<2x128xf32>
    %78 = tpu.matmul %76, %77, %cst_65 {dimension_numbers = #tpu.dot_dimension_numbers<[1], [0], [0], [1], [0, 0, 1, 1], [], []>} : vector<2x128xbf16>, vector<128x128xbf16>, vector<2x128xf32> -> vector<2x128xf32>
    %c0_66 = arith.constant 0 : index
    %c0_67 = arith.constant 0 : index
    %79 = vector.load %arg9[%c0_66, %c0_67] : memref<1x128xf32, #tpu.memory_space<vmem>>, vector<1x128xf32>
    %80 = vector.broadcast %79 : vector<1x128xf32> to vector<2x128xf32>
    %81 = arith.addf %78, %80 : vector<2x128xf32>
    %82 = arith.mulf %41, %81 : vector<2x128xf32>
    %cst_68 = arith.constant dense<0.000000e+00> : vector<2xf32>
    %83 = vector.multi_reduction <add>, %82, %cst_68 [1] : vector<2x128xf32> to vector<2xf32>
    %84 = vector.shape_cast %83 : vector<2xf32> to vector<2x1xf32>
    %85 = arith.mulf %41, %41 : vector<2x128xf32>
    %cst_69 = arith.constant dense<0.000000e+00> : vector<2xf32>
    %86 = vector.multi_reduction <add>, %85, %cst_69 [1] : vector<2x128xf32> to vector<2xf32>
    %87 = vector.shape_cast %86 : vector<2xf32> to vector<2x1xf32>
    %88 = arith.mulf %81, %81 : vector<2x128xf32>
    %cst_70 = arith.constant dense<0.000000e+00> : vector<2xf32>
    %89 = vector.multi_reduction <add>, %88, %cst_70 [1] : vector<2x128xf32> to vector<2xf32>
    %90 = vector.shape_cast %89 : vector<2xf32> to vector<2x1xf32>
    %cst_71 = arith.constant 1.000000e-24 : f32
    %91 = vector.broadcast %cst_71 : f32 to vector<2x1xf32>
    %92 = arith.maximumf %87, %91 : vector<2x1xf32>
    %93 = math.rsqrt %92 : vector<2x1xf32>
    %94 = arith.mulf %84, %93 : vector<2x1xf32>
    %cst_72 = arith.constant 1.000000e-24 : f32
    %95 = vector.broadcast %cst_72 : f32 to vector<2x1xf32>
    %96 = arith.maximumf %90, %95 : vector<2x1xf32>
    %97 = math.rsqrt %96 : vector<2x1xf32>
    %98 = arith.mulf %94, %97 : vector<2x1xf32>
    %99 = vector.shape_cast %98 : vector<2x1xf32> to vector<1x2x1xf32>
    %cst_73 = arith.constant dense<0.000000e+00> : vector<1xf32>
    %100 = vector.multi_reduction <add>, %99, %cst_73 [1, 2] : vector<1x2x1xf32> to vector<1xf32>
    %101 = vector.shape_cast %100 : vector<1xf32> to vector<1x1x1xf32>
    %102 = vector.extract %101[0, 0, 0] : f32 from vector<1x1x1xf32>
    %103 = arith.mulf %55, %68 : vector<2x128xf32>
    %cst_74 = arith.constant dense<0.000000e+00> : vector<2xf32>
    %104 = vector.multi_reduction <add>, %103, %cst_74 [1] : vector<2x128xf32> to vector<2xf32>
    %105 = vector.shape_cast %104 : vector<2xf32> to vector<2x1xf32>
    %106 = arith.mulf %55, %55 : vector<2x128xf32>
    %cst_75 = arith.constant dense<0.000000e+00> : vector<2xf32>
    %107 = vector.multi_reduction <add>, %106, %cst_75 [1] : vector<2x128xf32> to vector<2xf32>
    %108 = vector.shape_cast %107 : vector<2xf32> to vector<2x1xf32>
    %109 = arith.mulf %68, %68 : vector<2x128xf32>
    %cst_76 = arith.constant dense<0.000000e+00> : vector<2xf32>
    %110 = vector.multi_reduction <add>, %109, %cst_76 [1] : vector<2x128xf32> to vector<2xf32>
    %111 = vector.shape_cast %110 : vector<2xf32> to vector<2x1xf32>
    %cst_77 = arith.constant 1.000000e-24 : f32
    %112 = vector.broadcast %cst_77 : f32 to vector<2x1xf32>
    %113 = arith.maximumf %108, %112 : vector<2x1xf32>
    %114 = math.rsqrt %113 : vector<2x1xf32>
    %115 = arith.mulf %105, %114 : vector<2x1xf32>
    %cst_78 = arith.constant 1.000000e-24 : f32
    %116 = vector.broadcast %cst_78 : f32 to vector<2x1xf32>
    %117 = arith.maximumf %111, %116 : vector<2x1xf32>
    %118 = math.rsqrt %117 : vector<2x1xf32>
    %119 = arith.mulf %115, %118 : vector<2x1xf32>
    %120 = vector.shape_cast %119 : vector<2x1xf32> to vector<1x2x1xf32>
    %cst_79 = arith.constant dense<0.000000e+00> : vector<1xf32>
    %121 = vector.multi_reduction <add>, %120, %cst_79 [1, 2] : vector<1x2x1xf32> to vector<1xf32>
    %122 = vector.shape_cast %121 : vector<1xf32> to vector<1x1x1xf32>
    %123 = vector.extract %122[0, 0, 0] : f32 from vector<1x1x1xf32>
    %124 = arith.addf %102, %123 : f32
    %cst_80 = arith.constant 1.000000e+00 : f32
    %125 = arith.mulf %cst_80, %124 : f32
    %cst_81 = arith.constant 4.000000e+00 : f32
    %126 = arith.subf %cst_81, %125 : f32
    %127 = vector.broadcast %126 : f32 to vector<1x1xf32>
    %c0_82 = arith.constant 0 : index
    %c0_83 = arith.constant 0 : index
    %128 = vector.load %arg14[%c0_82, %c0_83] : memref<1x1xf32, #tpu.memory_space<vmem>>, vector<1x1xf32>
    tpu.vector_store %arg14[%c0_82, %c0_83], %127 {strides = array<i32>} : memref<1x1xf32, #tpu.memory_space<vmem>>, vector<1x1xf32>,
    return
  }
}

</mosaic_0001>

<llo_original>
// kernel: byol_forward.1
$region0: #{byol_forward.1}
  #allocation0 [shape = 'u32[]', space=smem, size = 0x4, offset = 0x4, fixed_abs, tag = 'smem constant byte address 0x4 - core index']
  #allocation1 [shape = 'u32[72,128]{1,0:T(1,128)}', space=vmem, size = 0x9000, scoped, tag = 'internal scratch']
  %s0 = inlined_call_operand.vmem [shape: bf16[2,1024], index: 0, kind: input, shape index: {}]
  %s1 = inlined_call_operand.vmem [shape: bf16[2,1024], index: 1, kind: input, shape index: {}]
  %s2 = inlined_call_operand.vmem [shape: bf16[1024,128], index: 2, kind: input, shape index: {}]
  %s3 = inlined_call_operand.vmem [shape: f32[1,128], index: 3, kind: input, shape index: {}]
  %s4 = inlined_call_operand.vmem [shape: bf16[128,128], index: 4, kind: input, shape index: {}]
  %s5 = inlined_call_operand.vmem [shape: f32[1,128], index: 5, kind: input, shape index: {}]
  %s6 = inlined_call_operand.vmem [shape: bf16[1024,128], index: 6, kind: input, shape index: {}]
  %s7 = inlined_call_operand.vmem [shape: f32[1,128], index: 7, kind: input, shape index: {}]
  %s8 = inlined_call_operand.vmem [shape: bf16[128,128], index: 8, kind: input, shape index: {}]
  %s9 = inlined_call_operand.vmem [shape: f32[1,128], index: 9, kind: input, shape index: {}]
  %s10 = inlined_call_operand.vmem [shape: bf16[128,128], index: 10, kind: input, shape index: {}]
  %s11 = inlined_call_operand.vmem [shape: f32[1,128], index: 11, kind: input, shape index: {}]
  %s12 = inlined_call_operand.vmem [shape: bf16[128,128], index: 12, kind: input, shape index: {}]
  %s13 = inlined_call_operand.vmem [shape: f32[1,128], index: 13, kind: input, shape index: {}]
  %s14 = inlined_call_operand.hbm [shape: f32[1,1], index: 14, kind: output, shape index: {}]
  %s15 = sld [smem:[#allocation0]]
  $region66: #{byol_forward.1} parent=0
    _
  %s17 = ssub.s32 1, %s15
  %s18 = scalar_select 0, %s17, %s15
  $region1: #{byol_forward.1} parent=0
    #allocation2 [shape = 'u8[512]{0}', space=vmem, size = 0x400, scoped, tag = 'output window, operand 0, single buffered']
    #allocation3 [shape = 's32[1]{0}', space=sflag, size = 0x4, scoped, tag = 'scoped memory for byol_forward.1']
    %19 = vsyncpa [#allocation3], 0
    // Predicated region
    $region2: #{byol_forward.1} parent=1 // pred_check
      _
    $region3: #{byol_forward.1} parent=1 // pred_check_branch
      %21 = sbr.rel (0) target = $region5
    $region4: #{byol_forward.1} parent=1 // pred_region
      _
    $region5: #{byol_forward.1} parent=1 // pred_fallthru
      _
    // Predicated region
    $region6: #{byol_forward.1} parent=1 // pred_check
      _
    $region7: #{byol_forward.1} parent=1 // pred_check_branch
      %23 = sbr.rel (0) target = $region9
    $region8: #{byol_forward.1} parent=1 // pred_region
      _
    $region9: #{byol_forward.1} parent=1 // pred_fallthru
      _
    // Predicated region
    $region10: #{byol_forward.1} parent=1 // pred_check
      _
    $region11: #{byol_forward.1} parent=1 // pred_check_branch
      %25 = sbr.rel (0) target = $region13
    $region12: #{byol_forward.1} parent=1 // pred_region
      _
    $region13: #{byol_forward.1} parent=1 // pred_fallthru
      _
    // Predicated region
    $region14: #{byol_forward.1} parent=1 // pred_check
      _
    $region15: #{byol_forward.1} parent=1 // pred_check_branch
      %27 = sbr.rel (0) target = $region17
    $region16: #{byol_forward.1} parent=1 // pred_region
      _
    $region17: #{byol_forward.1} parent=1 // pred_fallthru
      _
    // Predicated region
    $region18: #{byol_forward.1} parent=1 // pred_check
      _
    $region19: #{byol_forward.1} parent=1 // pred_check_branch
      %29 = sbr.rel (0) target = $region21
    $region20: #{byol_forward.1} parent=1 // pred_region
      _
    $region21: #{byol_forward.1} parent=1 // pred_fallthru
      _
    // Predicated region
    $region22: #{byol_forward.1} parent=1 // pred_check
      _
    $region23: #{byol_forward.1} parent=1 // pred_check_branch
      %31 = sbr.rel (0) target = $region25
    $region24: #{byol_forward.1} parent=1 // pred_region
      _
    $region25: #{byol_forward.1} parent=1 // pred_fallthru
      _
    // Predicated region
    $region26: #{byol_forward.1} parent=1 // pred_check
      _
    $region27: #{byol_forward.1} parent=1 // pred_check_branch
      %33 = sbr.rel (0) target = $region29
    $region28: #{byol_forward.1} parent=1 // pred_region
      _
    $region29: #{byol_forward.1} parent=1 // pred_fallthru
      _
    // Predicated region
    $region30: #{byol_forward.1} parent=1 // pred_check
      _
    $region31: #{byol_forward.1} parent=1 // pred_check_branch
      %35 = sbr.rel (0) target = $region33
    $region32: #{byol_forward.1} parent=1 // pred_region
      _
    $region33: #{byol_forward.1} parent=1 // pred_fallthru
      _
    // Predicated region
    $region34: #{byol_forward.1} parent=1 // pred_check
      _
    $region35: #{byol_forward.1} parent=1 // pred_check_branch
      %37 = sbr.rel (0) target = $region37
    $region36: #{byol_forward.1} parent=1 // pred_region
      _
    $region37: #{byol_forward.1} parent=1 // pred_fallthru
      _
    // Predicated region
    $region38: #{byol_forward.1} parent=1 // pred_check
      _
    $region39: #{byol_forward.1} parent=1 // pred_check_branch
      %39 = sbr.rel (0) target = $region41
    $region40: #{byol_forward.1} parent=1 // pred_region
      _
    $region41: #{byol_forward.1} parent=1 // pred_fallthru
      _
    // Predicated region
    $region42: #{byol_forward.1} parent=1 // pred_check
      _
    $region43: #{byol_forward.1} parent=1 // pred_check_branch
      %41 = sbr.rel (0) target = $region45
    $region44: #{byol_forward.1} parent=1 // pred_region
      _
    $region45: #{byol_forward.1} parent=1 // pred_fallthru
      _
    // Predicated region
    $region46: #{byol_forward.1} parent=1 // pred_check
      _
    $region47: #{byol_forward.1} parent=1 // pred_check_branch
      %43 = sbr.rel (0) target = $region49
    $region48: #{byol_forward.1} parent=1 // pred_region
      _
    $region49: #{byol_forward.1} parent=1 // pred_fallthru
      _
    // Predicated region
    $region50: #{byol_forward.1} parent=1 // pred_check
      _
    $region51: #{byol_forward.1} parent=1 // pred_check_branch
      %45 = sbr.rel (0) target = $region53
    $region52: #{byol_forward.1} parent=1 // pred_region
      _
    $region53: #{byol_forward.1} parent=1 // pred_fallthru
      _
    // Predicated region
    $region54: #{byol_forward.1} parent=1 // pred_check
      _
    $region55: #{byol_forward.1} parent=1 // pred_check_branch
      %47 = sbr.rel (0) target = $region57
    $region56: #{byol_forward.1} parent=1 // pred_region
      _
    $region57: #{byol_forward.1} parent=1 // pred_fallthru
      _
    %v48 = vld [vmem:[%s0] sm:$0xff]
    %v49 = vld [vmem:[%s1] sm:$0xff]
    %v50 = vld [vmem:[%s2] sm:$0xf]
    %v51 = vld [vmem:[%s2 + $0x4] sm:$0xf]
    %v52 = vld [vmem:[%s2 + $0x8] sm:$0xf]
    %v53 = vld [vmem:[%s2 + $0xc] sm:$0xf]
    %v54 = vld [vmem:[%s2 + $0x10] sm:$0xf]
    %v55 = vld [vmem:[%s2 + $0x14] sm:$0xf]
    %v56 = vld [vmem:[%s2 + $0x18] sm:$0xf]
    %v57 = vld [vmem:[%s2 + $0x1c] sm:$0xf]
    %v58 = vld [vmem:[%s2 + $0x20] sm:$0xf]
    %v59 = vld [vmem:[%s2 + $0x24] sm:$0xf]
    %v60 = vld [vmem:[%s2 + $0x28] sm:$0xf]
    %v61 = vld [vmem:[%s2 + $0x2c] sm:$0xf]
    %v62 = vld [vmem:[%s2 + $0x30] sm:$0xf]
    %v63 = vld [vmem:[%s2 + $0x34] sm:$0xf]
    %v64 = vld [vmem:[%s2 + $0x38] sm:$0xf]
    %v65 = vld [vmem:[%s2 + $0x3c] sm:$0xf]
    %v66 = vld [vmem:[%s2 + $0x40] sm:$0xf]
    %v67 = vld [vmem:[%s2 + $0x44] sm:$0xf]
    %v68 = vld [vmem:[%s2 + $0x48] sm:$0xf]
    %v69 = vld [vmem:[%s2 + $0x4c] sm:$0xf]
    %v70 = vld [vmem:[%s2 + $0x50] sm:$0xf]
    %v71 = vld [vmem:[%s2 + $0x54] sm:$0xf]
    %v72 = vld [vmem:[%s2 + $0x58] sm:$0xf]
    %v73 = vld [vmem:[%s2 + $0x5c] sm:$0xf]
    %v74 = vld [vmem:[%s2 + $0x60] sm:$0xf]
    %v75 = vld [vmem:[%s2 + $0x64] sm:$0xf]
    %v76 = vld [vmem:[%s2 + $0x68] sm:$0xf]
    %v77 = vld [vmem:[%s2 + $0x6c] sm:$0xf]
    %v78 = vld [vmem:[%s2 + $0x70] sm:$0xf]
    %v79 = vld [vmem:[%s2 + $0x74] sm:$0xf]
    %v80 = vld [vmem:[%s2 + $0x78] sm:$0xf]
    %v81 = vld [vmem:[%s2 + $0x7c] sm:$0xf]
    %v82 = vld [vmem:[%s2 + $0x80] sm:$0xf]
    %v83 = vld [vmem:[%s2 + $0x84] sm:$0xf]
    %v84 = vld [vmem:[%s2 + $0x88] sm:$0xf]
    %v85 = vld [vmem:[%s2 + $0x8c] sm:$0xf]
    %v86 = vld [vmem:[%s2 + $0x90] sm:$0xf]
    %v87 = vld [vmem:[%s2 + $0x94] sm:$0xf]
    %v88 = vld [vmem:[%s2 + $0x98] sm:$0xf]
    %v89 = vld [vmem:[%s2 + $0x9c] sm:$0xf]
    %v90 = vld [vmem:[%s2 + $0xa0] sm:$0xf]
    %v91 = vld [vmem:[%s2 + $0xa4] sm:$0xf]
    %v92 = vld [vmem:[%s2 + $0xa8] sm:$0xf]
    %v93 = vld [vmem:[%s2 + $0xac] sm:$0xf]
    %v94 = vld [vmem:[%s2 + $0xb0] sm:$0xf]
    %v95 = vld [vmem:[%s2 + $0xb4] sm:$0xf]
    %v96 = vld [vmem:[%s2 + $0xb8] sm:$0xf]
    %v97 = vld [vmem:[%s2 + $0xbc] sm:$0xf]
    %v98 = vld [vmem:[%s2 + $0xc0] sm:$0xf]
    %v99 = vld [vmem:[%s2 + $0xc4] sm:$0xf]
    %v100 = vld [vmem:[%s2 + $0xc8] sm:$0xf]
    %v101 = vld [vmem:[%s2 + $0xcc] sm:$0xf]
    %v102 = vld [vmem:[%s2 + $0xd0] sm:$0xf]
    %v103 = vld [vmem:[%s2 + $0xd4] sm:$0xf]
    %v104 = vld [vmem:[%s2 + $0xd8] sm:$0xf]
    %v105 = vld [vmem:[%s2 + $0xdc] sm:$0xf]
    %v106 = vld [vmem:[%s2 + $0xe0] sm:$0xf]
    %v107 = vld [vmem:[%s2 + $0xe4] sm:$0xf]
    %v108 = vld [vmem:[%s2 + $0xe8] sm:$0xf]
    %v109 = vld [vmem:[%s2 + $0xec] sm:$0xf]
    %v110 = vld [vmem:[%s2 + $0xf0] sm:$0xf]
    %v111 = vld [vmem:[%s2 + $0xf4] sm:$0xf]
    %v112 = vld [vmem:[%s2 + $0xf8] sm:$0xf]
    %v113 = vld [vmem:[%s2 + $0xfc] sm:$0xf]
    %v114 = vld [vmem:[%s2 + $0x100] sm:$0xf]
    %v115 = vld [vmem:[%s2 + $0x104] sm:$0xf]
    %v116 = vld [vmem:[%s2 + $0x108] sm:$0xf]
    %v117 = vld [vmem:[%s2 + $0x10c] sm:$0xf]
    %v118 = vld [vmem:[%s2 + $0x110] sm:$0xf]
    %v119 = vld [vmem:[%s2 + $0x114] sm:$0xf]
    %v120 = vld [vmem:[%s2 + $0x118] sm:$0xf]
    %v121 = vld [vmem:[%s2 + $0x11c] sm:$0xf]
    %v122 = vld [vmem:[%s2 + $0x120] sm:$0xf]
    %v123 = vld [vmem:[%s2 + $0x124] sm:$0xf]
    %v124 = vld [vmem:[%s2 + $0x128] sm:$0xf]
    %v125 = vld [vmem:[%s2 + $0x12c] sm:$0xf]
    %v126 = vld [vmem:[%s2 + $0x130] sm:$0xf]
    %v127 = vld [vmem:[%s2 + $0x134] sm:$0xf]
    %v128 = vld [vmem:[%s2 + $0x138] sm:$0xf]
    %v129 = vld [vmem:[%s2 + $0x13c] sm:$0xf]
    %v130 = vld [vmem:[%s2 + $0x140] sm:$0xf]
    %v131 = vld [vmem:[%s2 + $0x144] sm:$0xf]
    %v132 = vld [vmem:[%s2 + $0x148] sm:$0xf]
    %v133 = vld [vmem:[%s2 + $0x14c] sm:$0xf]
    %v134 = vld [vmem:[%s2 + $0x150] sm:$0xf]
    %v135 = vld [vmem:[%s2 + $0x154] sm:$0xf]
    %v136 = vld [vmem:[%s2 + $0x158] sm:$0xf]
    %v137 = vld [vmem:[%s2 + $0x15c] sm:$0xf]
    %v138 = vld [vmem:[%s2 + $0x160] sm:$0xf]
    %v139 = vld [vmem:[%s2 + $0x164] sm:$0xf]
    %v140 = vld [vmem:[%s2 + $0x168] sm:$0xf]
    %v141 = vld [vmem:[%s2 + $0x16c] sm:$0xf]
    %v142 = vld [vmem:[%s2 + $0x170] sm:$0xf]
    %v143 = vld [vmem:[%s2 + $0x174] sm:$0xf]
    %v144 = vld [vmem:[%s2 + $0x178] sm:$0xf]
    %v145 = vld [vmem:[%s2 + $0x17c] sm:$0xf]
    %v146 = vld [vmem:[%s2 + $0x180] sm:$0xf]
    %v147 = vld [vmem:[%s2 + $0x184] sm:$0xf]
    %v148 = vld [vmem:[%s2 + $0x188] sm:$0xf]
    %v149 = vld [vmem:[%s2 + $0x18c] sm:$0xf]
    %v150 = vld [vmem:[%s2 + $0x190] sm:$0xf]
    %v151 = vld [vmem:[%s2 + $0x194] sm:$0xf]
    %v152 = vld [vmem:[%s2 + $0x198] sm:$0xf]
    %v153 = vld [vmem:[%s2 + $0x19c] sm:$0xf]
    %v154 = vld [vmem:[%s2 + $0x1a0] sm:$0xf]
    %v155 = vld [vmem:[%s2 + $0x1a4] sm:$0xf]
    %v156 = vld [vmem:[%s2 + $0x1a8] sm:$0xf]
    %v157 = vld [vmem:[%s2 + $0x1ac] sm:$0xf]
    %v158 = vld [vmem:[%s2 + $0x1b0] sm:$0xf]
    %v159 = vld [vmem:[%s2 + $0x1b4] sm:$0xf]
    %v160 = vld [vmem:[%s2 + $0x1b8] sm:$0xf]
    %v161 = vld [vmem:[%s2 + $0x1bc] sm:$0xf]
    %v162 = vld [vmem:[%s2 + $0x1c0] sm:$0xf]
    %v163 = vld [vmem:[%s2 + $0x1c4] sm:$0xf]
    %v164 = vld [vmem:[%s2 + $0x1c8] sm:$0xf]
    %v165 = vld [vmem:[%s2 + $0x1cc] sm:$0xf]
    %v166 = vld [vmem:[%s2 + $0x1d0] sm:$0xf]
    %v167 = vld [vmem:[%s2 + $0x1d4] sm:$0xf]
    %v168 = vld [vmem:[%s2 + $0x1d8] sm:$0xf]
    %v169 = vld [vmem:[%s2 + $0x1dc] sm:$0xf]
    %v170 = vld [vmem:[%s2 + $0x1e0] sm:$0xf]
    %v171 = vld [vmem:[%s2 + $0x1e4] sm:$0xf]
    %v172 = vld [vmem:[%s2 + $0x1e8] sm:$0xf]
    %v173 = vld [vmem:[%s2 + $0x1ec] sm:$0xf]
    %v174 = vld [vmem:[%s2 + $0x1f0] sm:$0xf]
    %v175 = vld [vmem:[%s2 + $0x1f4] sm:$0xf]
    %v176 = vld [vmem:[%s2 + $0x1f8] sm:$0xf]
    %v177 = vld [vmem:[%s2 + $0x1fc] sm:$0xf]
    %v178 = vld [vmem:[%s3] sm:$0x1]
    %v180 = vperm.slane %v178, 0
    %183 = vst [vmem:[#allocation1] ss:$9 sm:$0xff] %v48
    %v184 = vld [vmem:[#allocation1] sm:$0xff]
    %v185 = vld [vmem:[#allocation1 + $0x9] sm:$0xff]
    %v186 = vld [vmem:[#allocation1 + $0x12] sm:$0xff]
    %v187 = vld [vmem:[#allocation1 + $0x1b] sm:$0xff]
    %v188 = vld [vmem:[#allocation1 + $0x24] sm:$0xff]
    %v189 = vld [vmem:[#allocation1 + $0x2d] sm:$0xff]
    %v190 = vld [vmem:[#allocation1 + $0x36] sm:$0xff]
    %v191 = vld [vmem:[#allocation1 + $0x3f] sm:$0xff]
    %v328 = vunpack.c.l.b16 %v50
    %v329 = vunpack.c.l.b16 %v51
    %v330 = vunpack.c.l.b16 %v52
    %v331 = vunpack.c.l.b16 %v53
    %v332 = vunpack.c.l.b16 %v54
    %v333 = vunpack.c.l.b16 %v55
    %v334 = vunpack.c.l.b16 %v56
    %v335 = vunpack.c.l.b16 %v57
    %v336 = vunpack.c.l.b16 %v58
    %v337 = vunpack.c.l.b16 %v59
    %v338 = vunpack.c.l.b16 %v60
    %v339 = vunpack.c.l.b16 %v61
    %v340 = vunpack.c.l.b16 %v62
    %v341 = vunpack.c.l.b16 %v63
    %v342 = vunpack.c.l.b16 %v64
    %v343 = vunpack.c.l.b16 %v65
    %v344 = vunpack.c.l.b16 %v66
    %v345 = vunpack.c.l.b16 %v67
    %v346 = vunpack.c.l.b16 %v68
    %v347 = vunpack.c.l.b16 %v69
    %v348 = vunpack.c.l.b16 %v70
    %v349 = vunpack.c.l.b16 %v71
    %v350 = vunpack.c.l.b16 %v72
    %v351 = vunpack.c.l.b16 %v73
    %v352 = vunpack.c.l.b16 %v74
    %v353 = vunpack.c.l.b16 %v75
    %v354 = vunpack.c.l.b16 %v76
    %v355 = vunpack.c.l.b16 %v77
    %v356 = vunpack.c.l.b16 %v78
    %v357 = vunpack.c.l.b16 %v79
    %v358 = vunpack.c.l.b16 %v80
    %v359 = vunpack.c.l.b16 %v81
    %v360 = vunpack.c.l.b16 %v82
    %v361 = vunpack.c.l.b16 %v83
    %v362 = vunpack.c.l.b16 %v84
    %v363 = vunpack.c.l.b16 %v85
    %v364 = vunpack.c.l.b16 %v86
    %v365 = vunpack.c.l.b16 %v87
    %v366 = vunpack.c.l.b16 %v88
    %v367 = vunpack.c.l.b16 %v89
    %v368 = vunpack.c.l.b16 %v90
    %v369 = vunpack.c.l.b16 %v91
    %v370 = vunpack.c.l.b16 %v92
    %v371 = vunpack.c.l.b16 %v93
    %v372 = vunpack.c.l.b16 %v94
    %v373 = vunpack.c.l.b16 %v95
    %v374 = vunpack.c.l.b16 %v96
    %v375 = vunpack.c.l.b16 %v97
    %v376 = vunpack.c.l.b16 %v98
    %v377 = vunpack.c.l.b16 %v99
    %v378 = vunpack.c.l.b16 %v100
    %v379 = vunpack.c.l.b16 %v101
    %v380 = vunpack.c.l.b16 %v102
    %v381 = vunpack.c.l.b16 %v103
    %v382 = vunpack.c.l.b16 %v104
    %v383 = vunpack.c.l.b16 %v105
    %v384 = vunpack.c.l.b16 %v106
    %v385 = vunpack.c.l.b16 %v107
    %v386 = vunpack.c.l.b16 %v108
    %v387 = vunpack.c.l.b16 %v109
    %v388 = vunpack.c.l.b16 %v110
    %v389 = vunpack.c.l.b16 %v111
    %v390 = vunpack.c.l.b16 %v112
    %v391 = vunpack.c.l.b16 %v113
    %v392 = vunpack.c.l.b16 %v114
    %v393 = vunpack.c.l.b16 %v115
    %v394 = vunpack.c.l.b16 %v116
    %v395 = vunpack.c.l.b16 %v117
    %v396 = vunpack.c.l.b16 %v118
    %v397 = vunpack.c.l.b16 %v119
    %v398 = vunpack.c.l.b16 %v120
    %v399 = vunpack.c.l.b16 %v121
    %v400 = vunpack.c.l.b16 %v122
    %v401 = vunpack.c.l.b16 %v123
    %v402 = vunpack.c.l.b16 %v124
    %v403 = vunpack.c.l.b16 %v125
    %v404 = vunpack.c.l.b16 %v126
    %v405 = vunpack.c.l.b16 %v127
    %v406 = vunpack.c.l.b16 %v128
    %v407 = vunpack.c.l.b16 %v129
    %v408 = vunpack.c.l.b16 %v130
    %v409 = vunpack.c.l.b16 %v131
    %v410 = vunpack.c.l.b16 %v132
    %v411 = vunpack.c.l.b16 %v133
    %v412 = vunpack.c.l.b16 %v134
    %v413 = vunpack.c.l.b16 %v135
    %v414 = vunpack.c.l.b16 %v136
    %v415 = vunpack.c.l.b16 %v137
    %v416 = vunpack.c.l.b16 %v138
    %v417 = vunpack.c.l.b16 %v139
    %v418 = vunpack.c.l.b16 %v140
    %v419 = vunpack.c.l.b16 %v141
    %v420 = vunpack.c.l.b16 %v142
    %v421 = vunpack.c.l.b16 %v143
    %v422 = vunpack.c.l.b16 %v144
    %v423 = vunpack.c.l.b16 %v145
    %v424 = vunpack.c.l.b16 %v146
    %v425 = vunpack.c.l.b16 %v147
    %v426 = vunpack.c.l.b16 %v148
    %v427 = vunpack.c.l.b16 %v149
    %v428 = vunpack.c.l.b16 %v150
    %v429 = vunpack.c.l.b16 %v151
    %v430 = vunpack.c.l.b16 %v152
    %v431 = vunpack.c.l.b16 %v153
    %v432 = vunpack.c.l.b16 %v154
    %v433 = vunpack.c.l.b16 %v155
    %v434 = vunpack.c.l.b16 %v156
    %v435 = vunpack.c.l.b16 %v157
    %v436 = vunpack.c.l.b16 %v158
    %v437 = vunpack.c.l.b16 %v159
    %v438 = vunpack.c.l.b16 %v160
    %v439 = vunpack.c.l.b16 %v161
    %v440 = vunpack.c.l.b16 %v162
    %v441 = vunpack.c.l.b16 %v163
    %v442 = vunpack.c.l.b16 %v164
    %v443 = vunpack.c.l.b16 %v165
    %v444 = vunpack.c.l.b16 %v166
    %v445 = vunpack.c.l.b16 %v167
    %v446 = vunpack.c.l.b16 %v168
    %v447 = vunpack.c.l.b16 %v169
    %v448 = vunpack.c.l.b16 %v170
    %v449 = vunpack.c.l.b16 %v171
    %v450 = vunpack.c.l.b16 %v172
    %v451 = vunpack.c.l.b16 %v173
    %v452 = vunpack.c.l.b16 %v174
    %v453 = vunpack.c.l.b16 %v175
    %v454 = vunpack.c.l.b16 %v176
    %v455 = vunpack.c.l.b16 %v177
    %v456 = vpack.c.b16 %v329, %v328
    %v457 = vpack.c.b16 %v331, %v330
    %v458 = vpack.c.b16 %v333, %v332
    %v459 = vpack.c.b16 %v335, %v334
    %v460 = vpack.c.b16 %v337, %v336
    %v461 = vpack.c.b16 %v339, %v338
    %v462 = vpack.c.b16 %v341, %v340
    %v463 = vpack.c.b16 %v343, %v342
    %v464 = vpack.c.b16 %v345, %v344
    %v465 = vpack.c.b16 %v347, %v346
    %v466 = vpack.c.b16 %v349, %v348
    %v467 = vpack.c.b16 %v351, %v350
    %v468 = vpack.c.b16 %v353, %v352
    %v469 = vpack.c.b16 %v355, %v354
    %v470 = vpack.c.b16 %v357, %v356
    %v471 = vpack.c.b16 %v359, %v358
    %v472 = vpack.c.b16 %v361, %v360
    %v473 = vpack.c.b16 %v363, %v362
    %v474 = vpack.c.b16 %v365, %v364
    %v475 = vpack.c.b16 %v367, %v366
    %v476 = vpack.c.b16 %v369, %v368
    %v477 = vpack.c.b16 %v371, %v370
    %v478 = vpack.c.b16 %v373, %v372
    %v479 = vpack.c.b16 %v375, %v374
    %v480 = vpack.c.b16 %v377, %v376
    %v481 = vpack.c.b16 %v379, %v378
    %v482 = vpack.c.b16 %v381, %v380
    %v483 = vpack.c.b16 %v383, %v382
    %v484 = vpack.c.b16 %v385, %v384
    %v485 = vpack.c.b16 %v387, %v386
    %v486 = vpack.c.b16 %v389, %v388
    %v487 = vpack.c.b16 %v391, %v390
    %v488 = vpack.c.b16 %v393, %v392
    %v489 = vpack.c.b16 %v395, %v394
    %v490 = vpack.c.b16 %v397, %v396
    %v491 = vpack.c.b16 %v399, %v398
    %v492 = vpack.c.b16 %v401, %v400
    %v493 = vpack.c.b16 %v403, %v402
    %v494 = vpack.c.b16 %v405, %v404
    %v495 = vpack.c.b16 %v407, %v406
    %v496 = vpack.c.b16 %v409, %v408
    %v497 = vpack.c.b16 %v411, %v410
    %v498 = vpack.c.b16 %v413, %v412
    %v499 = vpack.c.b16 %v415, %v414
    %v500 = vpack.c.b16 %v417, %v416
    %v501 = vpack.c.b16 %v419, %v418
    %v502 = vpack.c.b16 %v421, %v420
    %v503 = vpack.c.b16 %v423, %v422
    %v504 = vpack.c.b16 %v425, %v424
    %v505 = vpack.c.b16 %v427, %v426
    %v506 = vpack.c.b16 %v429, %v428
    %v507 = vpack.c.b16 %v431, %v430
    %v508 = vpack.c.b16 %v433, %v432
    %v509 = vpack.c.b16 %v435, %v434
    %v510 = vpack.c.b16 %v437, %v436
    %v511 = vpack.c.b16 %v439, %v438
    %v512 = vpack.c.b16 %v441, %v440
    %v513 = vpack.c.b16 %v443, %v442
    %v514 = vpack.c.b16 %v445, %v444
    %v515 = vpack.c.b16 %v447, %v446
    %v516 = vpack.c.b16 %v449, %v448
    %v517 = vpack.c.b16 %v451, %v450
    %v518 = vpack.c.b16 %v453, %v452
    %v519 = vpack.c.b16 %v455, %v454
    %584 = vmatpush.bf16.msra.mxu0 %v463
    %585 = vmatpush.bf16.msra.mxu0 %v462
    %586 = vmatpush.bf16.msra.mxu0 %v461
    %587 = vmatpush.bf16.msra.mxu0 %v460
    %588 = vmatpush.bf16.msra.mxu0 %v459
    %589 = vmatpush.bf16.msra.mxu0 %v458
    %590 = vmatpush.bf16.msra.mxu0 %v457
    %591 = vmatpush.bf16.msra.mxu0 %v456
    %592 = vmatmul.bf16.gmra.mxu0 %v184
    %v593 = vpop.f32.mrf.mxu0
    %v594 = vadd.f32 %v180, %v593
    %v595 = vpop.f32.mrf.mxu0
    %596 = vdwg.mxu0
    %597 = vmatpush.bf16.msra.mxu0 %v471
    %598 = vmatpush.bf16.msra.mxu0 %v470
    %599 = vmatpush.bf16.msra.mxu0 %v469
    %600 = vmatpush.bf16.msra.mxu0 %v468
    %601 = vmatpush.bf16.msra.mxu0 %v467
    %602 = vmatpush.bf16.msra.mxu0 %v466
    %603 = vmatpush.bf16.msra.mxu0 %v465
    %604 = vmatpush.bf16.msra.mxu0 %v464
    %605 = vmatmul.bf16.gmra.mxu0 %v185
    %v606 = vpop.f32.mrf.mxu0
    %v607 = vadd.f32 %v594, %v606
    %v608 = vpop.f32.mrf.mxu0
    %609 = vdwg.mxu0
    %610 = vmatpush.bf16.msra.mxu0 %v479
    %611 = vmatpush.bf16.msra.mxu0 %v478
    %612 = vmatpush.bf16.msra.mxu0 %v477
    %613 = vmatpush.bf16.msra.mxu0 %v476
    %614 = vmatpush.bf16.msra.mxu0 %v475
    %615 = vmatpush.bf16.msra.mxu0 %v474
    %616 = vmatpush.bf16.msra.mxu0 %v473
    %617 = vmatpush.bf16.msra.mxu0 %v472
    %618 = vmatmul.bf16.gmra.mxu0 %v186
    %v619 = vpop.f32.mrf.mxu0
    %v620 = vadd.f32 %v607, %v619
    %v621 = vpop.f32.mrf.mxu0
    %622 = vdwg.mxu0
    %623 = vmatpush.bf16.msra.mxu0 %v487
    %624 = vmatpush.bf16.msra.mxu0 %v486
    %625 = vmatpush.bf16.msra.mxu0 %v485
    %626 = vmatpush.bf16.msra.mxu0 %v484
    %627 = vmatpush.bf16.msra.mxu0 %v483
    %628 = vmatpush.bf16.msra.mxu0 %v482
    %629 = vmatpush.bf16.msra.mxu0 %v481
    %630 = vmatpush.bf16.msra.mxu0 %v480
    %631 = vmatmul.bf16.gmra.mxu0 %v187
    %v632 = vpop.f32.mrf.mxu0
    %v633 = vadd.f32 %v620, %v632
    %v634 = vpop.f32.mrf.mxu0
    %635 = vdwg.mxu0
    %636 = vmatpush.bf16.msra.mxu0 %v495
    %637 = vmatpush.bf16.msra.mxu0 %v494
    %638 = vmatpush.bf16.msra.mxu0 %v493
    %639 = vmatpush.bf16.msra.mxu0 %v492
    %640 = vmatpush.bf16.msra.mxu0 %v491
    %641 = vmatpush.bf16.msra.mxu0 %v490
    %642 = vmatpush.bf16.msra.mxu0 %v489
    %643 = vmatpush.bf16.msra.mxu0 %v488
    %644 = vmatmul.bf16.gmra.mxu0 %v188
    %v645 = vpop.f32.mrf.mxu0
    %v646 = vadd.f32 %v633, %v645
    %v647 = vpop.f32.mrf.mxu0
    %648 = vdwg.mxu0
    %649 = vmatpush.bf16.msra.mxu0 %v503
    %650 = vmatpush.bf16.msra.mxu0 %v502
    %651 = vmatpush.bf16.msra.mxu0 %v501
    %652 = vmatpush.bf16.msra.mxu0 %v500
    %653 = vmatpush.bf16.msra.mxu0 %v499
    %654 = vmatpush.bf16.msra.mxu0 %v498
    %655 = vmatpush.bf16.msra.mxu0 %v497
    %656 = vmatpush.bf16.msra.mxu0 %v496
    %657 = vmatmul.bf16.gmra.mxu0 %v189
    %v658 = vpop.f32.mrf.mxu0
    %v659 = vadd.f32 %v646, %v658
    %v660 = vpop.f32.mrf.mxu0
    %661 = vdwg.mxu0
    %662 = vmatpush.bf16.msra.mxu0 %v511
    %663 = vmatpush.bf16.msra.mxu0 %v510
    %664 = vmatpush.bf16.msra.mxu0 %v509
    %665 = vmatpush.bf16.msra.mxu0 %v508
    %666 = vmatpush.bf16.msra.mxu0 %v507
    %667 = vmatpush.bf16.msra.mxu0 %v506
    %668 = vmatpush.bf16.msra.mxu0 %v505
    %669 = vmatpush.bf16.msra.mxu0 %v504
    %670 = vmatmul.bf16.gmra.mxu0 %v190
    %v671 = vpop.f32.mrf.mxu0
    %v672 = vadd.f32 %v659, %v671
    %v673 = vpop.f32.mrf.mxu0
    %674 = vdwg.mxu0
    %675 = vmatpush.bf16.msra.mxu0 %v519
    %676 = vmatpush.bf16.msra.mxu0 %v518
    %677 = vmatpush.bf16.msra.mxu0 %v517
    %678 = vmatpush.bf16.msra.mxu0 %v516
    %679 = vmatpush.bf16.msra.mxu0 %v515
    %680 = vmatpush.bf16.msra.mxu0 %v514
    %681 = vmatpush.bf16.msra.mxu0 %v513
    %682 = vmatpush.bf16.msra.mxu0 %v512
    %683 = vmatmul.bf16.gmra.mxu0 %v191
    %v684 = vpop.f32.mrf.mxu0
    %v685 = vadd.f32 %v672, %v684
    %v686 = vpop.f32.mrf.mxu0
    %687 = vdwg.mxu0
    %v688 = vmax.f32 %v685, 0.0
    %v689 = vpack.c.bf16 %v688, %v688
    %v690 = vld [vmem:[%s4] sm:$0xf]
    %v691 = vld [vmem:[%s4 + $0x4] sm:$0xf]
    %v692 = vld [vmem:[%s4 + $0x8] sm:$0xf]
    %v693 = vld [vmem:[%s4 + $0xc] sm:$0xf]
    %v694 = vld [vmem:[%s4 + $0x10] sm:$0xf]
    %v695 = vld [vmem:[%s4 + $0x14] sm:$0xf]
    %v696 = vld [vmem:[%s4 + $0x18] sm:$0xf]
    %v697 = vld [vmem:[%s4 + $0x1c] sm:$0xf]
    %v698 = vld [vmem:[%s4 + $0x20] sm:$0xf]
    %v699 = vld [vmem:[%s4 + $0x24] sm:$0xf]
    %v700 = vld [vmem:[%s4 + $0x28] sm:$0xf]
    %v701 = vld [vmem:[%s4 + $0x2c] sm:$0xf]
    %v702 = vld [vmem:[%s4 + $0x30] sm:$0xf]
    %v703 = vld [vmem:[%s4 + $0x34] sm:$0xf]
    %v704 = vld [vmem:[%s4 + $0x38] sm:$0xf]
    %v705 = vld [vmem:[%s4 + $0x3c] sm:$0xf]
    %v706 = vld [vmem:[%s5] sm:$0x1]
    %v708 = vperm.slane %v706, 0
    %v726 = vunpack.c.l.b16 %v690
    %v727 = vunpack.c.l.b16 %v691
    %v728 = vunpack.c.l.b16 %v692
    %v729 = vunpack.c.l.b16 %v693
    %v730 = vunpack.c.l.b16 %v694
    %v731 = vunpack.c.l.b16 %v695
    %v732 = vunpack.c.l.b16 %v696
    %v733 = vunpack.c.l.b16 %v697
    %v734 = vunpack.c.l.b16 %v698
    %v735 = vunpack.c.l.b16 %v699
    %v736 = vunpack.c.l.b16 %v700
    %v737 = vunpack.c.l.b16 %v701
    %v738 = vunpack.c.l.b16 %v702
    %v739 = vunpack.c.l.b16 %v703
    %v740 = vunpack.c.l.b16 %v704
    %v741 = vunpack.c.l.b16 %v705
    %v742 = vpack.c.b16 %v727, %v726
    %v743 = vpack.c.b16 %v729, %v728
    %v744 = vpack.c.b16 %v731, %v730
    %v745 = vpack.c.b16 %v733, %v732
    %v746 = vpack.c.b16 %v735, %v734
    %v747 = vpack.c.b16 %v737, %v736
    %v748 = vpack.c.b16 %v739, %v738
    %v749 = vpack.c.b16 %v741, %v740
    %758 = vmatpush.bf16.msra.mxu0 %v749
    %759 = vmatpush.bf16.msra.mxu0 %v748
    %760 = vmatpush.bf16.msra.mxu0 %v747
    %761 = vmatpush.bf16.msra.mxu0 %v746
    %762 = vmatpush.bf16.msra.mxu0 %v745
    %763 = vmatpush.bf16.msra.mxu0 %v744
    %764 = vmatpush.bf16.msra.mxu0 %v743
    %765 = vmatpush.bf16.msra.mxu0 %v742
    %766 = vmatmul.bf16.gmra.mxu0 %v689
    %v767 = vpop.f32.mrf.mxu0
    %v768 = vadd.f32 %v708, %v767
    %v769 = vpop.f32.mrf.mxu0
    %770 = vdwg.mxu0
    %772 = vst [vmem:[#allocation1] ss:$9 sm:$0xff] %v49
    %v773 = vld [vmem:[#allocation1] sm:$0xff]
    %v774 = vld [vmem:[#allocation1 + $0x9] sm:$0xff]
    %v775 = vld [vmem:[#allocation1 + $0x12] sm:$0xff]
    %v776 = vld [vmem:[#allocation1 + $0x1b] sm:$0xff]
    %v777 = vld [vmem:[#allocation1 + $0x24] sm:$0xff]
    %v778 = vld [vmem:[#allocation1 + $0x2d] sm:$0xff]
    %v779 = vld [vmem:[#allocation1 + $0x36] sm:$0xff]
    %v780 = vld [vmem:[#allocation1 + $0x3f] sm:$0xff]
    %789 = vmatpush.bf16.msra.mxu0 %v463
    %790 = vmatpush.bf16.msra.mxu0 %v462
    %791 = vmatpush.bf16.msra.mxu0 %v461
    %792 = vmatpush.bf16.msra.mxu0 %v460
    %793 = vmatpush.bf16.msra.mxu0 %v459
    %794 = vmatpush.bf16.msra.mxu0 %v458
    %795 = vmatpush.bf16.msra.mxu0 %v457
    %796 = vmatpush.bf16.msra.mxu0 %v456
    %797 = vmatmul.bf16.gmra.mxu0 %v773
    %v798 = vpop.f32.mrf.mxu0
    %v799 = vadd.f32 %v180, %v798
    %v800 = vpop.f32.mrf.mxu0
    %801 = vdwg.mxu0
    %802 = vmatpush.bf16.msra.mxu0 %v471
    %803 = vmatpush.bf16.msra.mxu0 %v470
    %804 = vmatpush.bf16.msra.mxu0 %v469
    %805 = vmatpush.bf16.msra.mxu0 %v468
    %806 = vmatpush.bf16.msra.mxu0 %v467
    %807 = vmatpush.bf16.msra.mxu0 %v466
    %808 = vmatpush.bf16.msra.mxu0 %v465
    %809 = vmatpush.bf16.msra.mxu0 %v464
    %810 = vmatmul.bf16.gmra.mxu0 %v774
    %v811 = vpop.f32.mrf.mxu0
    %v812 = vadd.f32 %v799, %v811
    %v813 = vpop.f32.mrf.mxu0
    %814 = vdwg.mxu0
    %815 = vmatpush.bf16.msra.mxu0 %v479
    %816 = vmatpush.bf16.msra.mxu0 %v478
    %817 = vmatpush.bf16.msra.mxu0 %v477
    %818 = vmatpush.bf16.msra.mxu0 %v476
    %819 = vmatpush.bf16.msra.mxu0 %v475
    %820 = vmatpush.bf16.msra.mxu0 %v474
    %821 = vmatpush.bf16.msra.mxu0 %v473
    %822 = vmatpush.bf16.msra.mxu0 %v472
    %823 = vmatmul.bf16.gmra.mxu0 %v775
    %v824 = vpop.f32.mrf.mxu0
    %v825 = vadd.f32 %v812, %v824
    %v826 = vpop.f32.mrf.mxu0
    %827 = vdwg.mxu0
    %828 = vmatpush.bf16.msra.mxu0 %v487
    %829 = vmatpush.bf16.msra.mxu0 %v486
    %830 = vmatpush.bf16.msra.mxu0 %v485
    %831 = vmatpush.bf16.msra.mxu0 %v484
    %832 = vmatpush.bf16.msra.mxu0 %v483
    %833 = vmatpush.bf16.msra.mxu0 %v482
    %834 = vmatpush.bf16.msra.mxu0 %v481
    %835 = vmatpush.bf16.msra.mxu0 %v480
    %836 = vmatmul.bf16.gmra.mxu0 %v776
    %v837 = vpop.f32.mrf.mxu0
    %v838 = vadd.f32 %v825, %v837
    %v839 = vpop.f32.mrf.mxu0
    %840 = vdwg.mxu0
    %841 = vmatpush.bf16.msra.mxu0 %v495
    %842 = vmatpush.bf16.msra.mxu0 %v494
    %843 = vmatpush.bf16.msra.mxu0 %v493
    %844 = vmatpush.bf16.msra.mxu0 %v492
    %845 = vmatpush.bf16.msra.mxu0 %v491
    %846 = vmatpush.bf16.msra.mxu0 %v490
    %847 = vmatpush.bf16.msra.mxu0 %v489
    %848 = vmatpush.bf16.msra.mxu0 %v488
    %849 = vmatmul.bf16.gmra.mxu0 %v777
    %v850 = vpop.f32.mrf.mxu0
    %v851 = vadd.f32 %v838, %v850
    %v852 = vpop.f32.mrf.mxu0
    %853 = vdwg.mxu0
    %854 = vmatpush.bf16.msra.mxu0 %v503
    %855 = vmatpush.bf16.msra.mxu0 %v502
    %856 = vmatpush.bf16.msra.mxu0 %v501
    %857 = vmatpush.bf16.msra.mxu0 %v500
    %858 = vmatpush.bf16.msra.mxu0 %v499
    %859 = vmatpush.bf16.msra.mxu0 %v498
    %860 = vmatpush.bf16.msra.mxu0 %v497
    %861 = vmatpush.bf16.msra.mxu0 %v496
    %862 = vmatmul.bf16.gmra.mxu0 %v778
    %v863 = vpop.f32.mrf.mxu0
    %v864 = vadd.f32 %v851, %v863
    %v865 = vpop.f32.mrf.mxu0
    %866 = vdwg.mxu0
    %867 = vmatpush.bf16.msra.mxu0 %v511
    %868 = vmatpush.bf16.msra.mxu0 %v510
    %869 = vmatpush.bf16.msra.mxu0 %v509
    %870 = vmatpush.bf16.msra.mxu0 %v508
    %871 = vmatpush.bf16.msra.mxu0 %v507
    %872 = vmatpush.bf16.msra.mxu0 %v506
    %873 = vmatpush.bf16.msra.mxu0 %v505
    %874 = vmatpush.bf16.msra.mxu0 %v504
    %875 = vmatmul.bf16.gmra.mxu0 %v779
    %v876 = vpop.f32.mrf.mxu0
    %v877 = vadd.f32 %v864, %v876
    %v878 = vpop.f32.mrf.mxu0
    %879 = vdwg.mxu0
    %880 = vmatpush.bf16.msra.mxu0 %v519
    %881 = vmatpush.bf16.msra.mxu0 %v518
    %882 = vmatpush.bf16.msra.mxu0 %v517
    %883 = vmatpush.bf16.msra.mxu0 %v516
    %884 = vmatpush.bf16.msra.mxu0 %v515
    %885 = vmatpush.bf16.msra.mxu0 %v514
    %886 = vmatpush.bf16.msra.mxu0 %v513
    %887 = vmatpush.bf16.msra.mxu0 %v512
    %888 = vmatmul.bf16.gmra.mxu0 %v780
    %v889 = vpop.f32.mrf.mxu0
    %v890 = vadd.f32 %v877, %v889
    %v891 = vpop.f32.mrf.mxu0
    %892 = vdwg.mxu0
    %v893 = vmax.f32 %v890, 0.0
    %v894 = vpack.c.bf16 %v893, %v893
    %895 = vmatpush.bf16.msra.mxu0 %v749
    %896 = vmatpush.bf16.msra.mxu0 %v748
    %897 = vmatpush.bf16.msra.mxu0 %v747
    %898 = vmatpush.bf16.msra.mxu0 %v746
    %899 = vmatpush.bf16.msra.mxu0 %v745
    %900 = vmatpush.bf16.msra.mxu0 %v744
    %901 = vmatpush.bf16.msra.mxu0 %v743
    %902 = vmatpush.bf16.msra.mxu0 %v742
    %903 = vmatmul.bf16.gmra.mxu0 %v894
    %v904 = vpop.f32.mrf.mxu0
    %v905 = vadd.f32 %v708, %v904
    %v906 = vpop.f32.mrf.mxu0
    %907 = vdwg.mxu0
    %v908 = vpack.c.bf16 %v768, %v768
    %v909 = vld [vmem:[%s10] sm:$0xf]
    %v910 = vld [vmem:[%s10 + $0x4] sm:$0xf]
    %v911 = vld [vmem:[%s10 + $0x8] sm:$0xf]
    %v912 = vld [vmem:[%s10 + $0xc] sm:$0xf]
    %v913 = vld [vmem:[%s10 + $0x10] sm:$0xf]
    %v914 = vld [vmem:[%s10 + $0x14] sm:$0xf]
    %v915 = vld [vmem:[%s10 + $0x18] sm:$0xf]
    %v916 = vld [vmem:[%s10 + $0x1c] sm:$0xf]
    %v917 = vld [vmem:[%s10 + $0x20] sm:$0xf]
    %v918 = vld [vmem:[%s10 + $0x24] sm:$0xf]
    %v919 = vld [vmem:[%s10 + $0x28] sm:$0xf]
    %v920 = vld [vmem:[%s10 + $0x2c] sm:$0xf]
    %v921 = vld [vmem:[%s10 + $0x30] sm:$0xf]
    %v922 = vld [vmem:[%s10 + $0x34] sm:$0xf]
    %v923 = vld [vmem:[%s10 + $0x38] sm:$0xf]
    %v924 = vld [vmem:[%s10 + $0x3c] sm:$0xf]
    %v925 = vld [vmem:[%s11] sm:$0x1]
    %v927 = vperm.slane %v925, 0
    %v945 = vunpack.c.l.b16 %v909
    %v946 = vunpack.c.l.b16 %v910
    %v947 = vunpack.c.l.b16 %v911
    %v948 = vunpack.c.l.b16 %v912
    %v949 = vunpack.c.l.b16 %v913
    %v950 = vunpack.c.l.b16 %v914
    %v951 = vunpack.c.l.b16 %v915
    %v952 = vunpack.c.l.b16 %v916
    %v953 = vunpack.c.l.b16 %v917
    %v954 = vunpack.c.l.b16 %v918
    %v955 = vunpack.c.l.b16 %v919
    %v956 = vunpack.c.l.b16 %v920
    %v957 = vunpack.c.l.b16 %v921
    %v958 = vunpack.c.l.b16 %v922
    %v959 = vunpack.c.l.b16 %v923
    %v960 = vunpack.c.l.b16 %v924
    %v961 = vpack.c.b16 %v946, %v945
    %v962 = vpack.c.b16 %v948, %v947
    %v963 = vpack.c.b16 %v950, %v949
    %v964 = vpack.c.b16 %v952, %v951
    %v965 = vpack.c.b16 %v954, %v953
    %v966 = vpack.c.b16 %v956, %v955
    %v967 = vpack.c.b16 %v958, %v957
    %v968 = vpack.c.b16 %v960, %v959
    %977 = vmatpush.bf16.msra.mxu0 %v968
    %978 = vmatpush.bf16.msra.mxu0 %v967
    %979 = vmatpush.bf16.msra.mxu0 %v966
    %980 = vmatpush.bf16.msra.mxu0 %v965
    %981 = vmatpush.bf16.msra.mxu0 %v964
    %982 = vmatpush.bf16.msra.mxu0 %v963
    %983 = vmatpush.bf16.msra.mxu0 %v962
    %984 = vmatpush.bf16.msra.mxu0 %v961
    %985 = vmatmul.bf16.gmra.mxu0 %v908
    %v986 = vpop.f32.mrf.mxu0
    %v987 = vadd.f32 %v927, %v986
    %v988 = vpop.f32.mrf.mxu0
    %989 = vdwg.mxu0
    %v990 = vmax.f32 %v987, 0.0
    %v991 = vpack.c.bf16 %v990, %v990
    %v992 = vld [vmem:[%s12] sm:$0xf]
    %v993 = vld [vmem:[%s12 + $0x4] sm:$0xf]
    %v994 = vld [vmem:[%s12 + $0x8] sm:$0xf]
    %v995 = vld [vmem:[%s12 + $0xc] sm:$0xf]
    %v996 = vld [vmem:[%s12 + $0x10] sm:$0xf]
    %v997 = vld [vmem:[%s12 + $0x14] sm:$0xf]
    %v998 = vld [vmem:[%s12 + $0x18] sm:$0xf]
    %v999 = vld [vmem:[%s12 + $0x1c] sm:$0xf]
    %v1000 = vld [vmem:[%s12 + $0x20] sm:$0xf]
    %v1001 = vld [vmem:[%s12 + $0x24] sm:$0xf]
    %v1002 = vld [vmem:[%s12 + $0x28] sm:$0xf]
    %v1003 = vld [vmem:[%s12 + $0x2c] sm:$0xf]
    %v1004 = vld [vmem:[%s12 + $0x30] sm:$0xf]
    %v1005 = vld [vmem:[%s12 + $0x34] sm:$0xf]
    %v1006 = vld [vmem:[%s12 + $0x38] sm:$0xf]
    %v1007 = vld [vmem:[%s12 + $0x3c] sm:$0xf]
    %v1008 = vld [vmem:[%s13] sm:$0x1]
    %v1010 = vperm.slane %v1008, 0
    %v1028 = vunpack.c.l.b16 %v992
    %v1029 = vunpack.c.l.b16 %v993
    %v1030 = vunpack.c.l.b16 %v994
    %v1031 = vunpack.c.l.b16 %v995
    %v1032 = vunpack.c.l.b16 %v996
    %v1033 = vunpack.c.l.b16 %v997
    %v1034 = vunpack.c.l.b16 %v998
    %v1035 = vunpack.c.l.b16 %v999
    %v1036 = vunpack.c.l.b16 %v1000
    %v1037 = vunpack.c.l.b16 %v1001
    %v1038 = vunpack.c.l.b16 %v1002
    %v1039 = vunpack.c.l.b16 %v1003
    %v1040 = vunpack.c.l.b16 %v1004
    %v1041 = vunpack.c.l.b16 %v1005
    %v1042 = vunpack.c.l.b16 %v1006
    %v1043 = vunpack.c.l.b16 %v1007
    %v1044 = vpack.c.b16 %v1029, %v1028
    %v1045 = vpack.c.b16 %v1031, %v1030
    %v1046 = vpack.c.b16 %v1033, %v1032
    %v1047 = vpack.c.b16 %v1035, %v1034
    %v1048 = vpack.c.b16 %v1037, %v1036
    %v1049 = vpack.c.b16 %v1039, %v1038
    %v1050 = vpack.c.b16 %v1041, %v1040
    %v1051 = vpack.c.b16 %v1043, %v1042
    %1060 = vmatpush.bf16.msra.mxu0 %v1051
    %1061 = vmatpush.bf16.msra.mxu0 %v1050
    %1062 = vmatpush.bf16.msra.mxu0 %v1049
    %1063 = vmatpush.bf16.msra.mxu0 %v1048
    %1064 = vmatpush.bf16.msra.mxu0 %v1047
    %1065 = vmatpush.bf16.msra.mxu0 %v1046
    %1066 = vmatpush.bf16.msra.mxu0 %v1045
    %1067 = vmatpush.bf16.msra.mxu0 %v1044
    %1068 = vmatmul.bf16.gmra.mxu0 %v991
    %v1069 = vpop.f32.mrf.mxu0
    %v1070 = vadd.f32 %v1010, %v1069
    %v1071 = vpop.f32.mrf.mxu0
    %1072 = vdwg.mxu0
    %v1073 = vpack.c.bf16 %v905, %v905
    %1074 = vmatpush.bf16.msra.mxu0 %v968
    %1075 = vmatpush.bf16.msra.mxu0 %v967
    %1076 = vmatpush.bf16.msra.mxu0 %v966
    %1077 = vmatpush.bf16.msra.mxu0 %v965
    %1078 = vmatpush.bf16.msra.mxu0 %v964
    %1079 = vmatpush.bf16.msra.mxu0 %v963
    %1080 = vmatpush.bf16.msra.mxu0 %v962
    %1081 = vmatpush.bf16.msra.mxu0 %v961
    %1082 = vmatmul.bf16.gmra.mxu0 %v1073
    %v1083 = vpop.f32.mrf.mxu0
    %v1084 = vadd.f32 %v927, %v1083
    %v1085 = vpop.f32.mrf.mxu0
    %1086 = vdwg.mxu0
    %v1087 = vmax.f32 %v1084, 0.0
    %v1088 = vpack.c.bf16 %v1087, %v1087
    %1089 = vmatpush.bf16.msra.mxu0 %v1051
    %1090 = vmatpush.bf16.msra.mxu0 %v1050
    %1091 = vmatpush.bf16.msra.mxu0 %v1049
    %1092 = vmatpush.bf16.msra.mxu0 %v1048
    %1093 = vmatpush.bf16.msra.mxu0 %v1047
    %1094 = vmatpush.bf16.msra.mxu0 %v1046
    %1095 = vmatpush.bf16.msra.mxu0 %v1045
    %1096 = vmatpush.bf16.msra.mxu0 %v1044
    %1097 = vmatmul.bf16.gmra.mxu0 %v1088
    %v1098 = vpop.f32.mrf.mxu0
    %v1099 = vadd.f32 %v1010, %v1098
    %v1100 = vpop.f32.mrf.mxu0
    %1101 = vdwg.mxu0
    %v1102 = vld [vmem:[%s6] sm:$0xf]
    %v1103 = vld [vmem:[%s6 + $0x4] sm:$0xf]
    %v1104 = vld [vmem:[%s6 + $0x8] sm:$0xf]
    %v1105 = vld [vmem:[%s6 + $0xc] sm:$0xf]
    %v1106 = vld [vmem:[%s6 + $0x10] sm:$0xf]
    %v1107 = vld [vmem:[%s6 + $0x14] sm:$0xf]
    %v1108 = vld [vmem:[%s6 + $0x18] sm:$0xf]
    %v1109 = vld [vmem:[%s6 + $0x1c] sm:$0xf]
    %v1110 = vld [vmem:[%s6 + $0x20] sm:$0xf]
    %v1111 = vld [vmem:[%s6 + $0x24] sm:$0xf]
    %v1112 = vld [vmem:[%s6 + $0x28] sm:$0xf]
    %v1113 = vld [vmem:[%s6 + $0x2c] sm:$0xf]
    %v1114 = vld [vmem:[%s6 + $0x30] sm:$0xf]
    %v1115 = vld [vmem:[%s6 + $0x34] sm:$0xf]
    %v1116 = vld [vmem:[%s6 + $0x38] sm:$0xf]
    %v1117 = vld [vmem:[%s6 + $0x3c] sm:$0xf]
    %v1118 = vld [vmem:[%s6 + $0x40] sm:$0xf]
    %v1119 = vld [vmem:[%s6 + $0x44] sm:$0xf]
    %v1120 = vld [vmem:[%s6 + $0x48] sm:$0xf]
    %v1121 = vld [vmem:[%s6 + $0x4c] sm:$0xf]
    %v1122 = vld [vmem:[%s6 + $0x50] sm:$0xf]
    %v1123 = vld [vmem:[%s6 + $0x54] sm:$0xf]
    %v1124 = vld [vmem:[%s6 + $0x58] sm:$0xf]
    %v1125 = vld [vmem:[%s6 + $0x5c] sm:$0xf]
    %v1126 = vld [vmem:[%s6 + $0x60] sm:$0xf]
    %v1127 = vld [vmem:[%s6 + $0x64] sm:$0xf]
    %v1128 = vld [vmem:[%s6 + $0x68] sm:$0xf]
    %v1129 = vld [vmem:[%s6 + $0x6c] sm:$0xf]
    %v1130 = vld [vmem:[%s6 + $0x70] sm:$0xf]
    %v1131 = vld [vmem:[%s6 + $0x74] sm:$0xf]
    %v1132 = vld [vmem:[%s6 + $0x78] sm:$0xf]
    %v1133 = vld [vmem:[%s6 + $0x7c] sm:$0xf]
    %v1134 = vld [vmem:[%s6 + $0x80] sm:$0xf]
    %v1135 = vld [vmem:[%s6 + $0x84] sm:$0xf]
    %v1136 = vld [vmem:[%s6 + $0x88] sm:$0xf]
    %v1137 = vld [vmem:[%s6 + $0x8c] sm:$0xf]
    %v1138 = vld [vmem:[%s6 + $0x90] sm:$0xf]
    %v1139 = vld [vmem:[%s6 + $0x94] sm:$0xf]
    %v1140 = vld [vmem:[%s6 + $0x98] sm:$0xf]
    %v1141 = vld [vmem:[%s6 + $0x9c] sm:$0xf]
    %v1142 = vld [vmem:[%s6 + $0xa0] sm:$0xf]
    %v1143 = vld [vmem:[%s6 + $0xa4] sm:$0xf]
    %v1144 = vld [vmem:[%s6 + $0xa8] sm:$0xf]
    %v1145 = vld [vmem:[%s6 + $0xac] sm:$0xf]
    %v1146 = vld [vmem:[%s6 + $0xb0] sm:$0xf]
    %v1147 = vld [vmem:[%s6 + $0xb4] sm:$0xf]
    %v1148 = vld [vmem:[%s6 + $0xb8] sm:$0xf]
    %v1149 = vld [vmem:[%s6 + $0xbc] sm:$0xf]
    %v1150 = vld [vmem:[%s6 + $0xc0] sm:$0xf]
    %v1151 = vld [vmem:[%s6 + $0xc4] sm:$0xf]
    %v1152 = vld [vmem:[%s6 + $0xc8] sm:$0xf]
    %v1153 = vld [vmem:[%s6 + $0xcc] sm:$0xf]
    %v1154 = vld [vmem:[%s6 + $0xd0] sm:$0xf]
    %v1155 = vld [vmem:[%s6 + $0xd4] sm:$0xf]
    %v1156 = vld [vmem:[%s6 + $0xd8] sm:$0xf]
    %v1157 = vld [vmem:[%s6 + $0xdc] sm:$0xf]
    %v1158 = vld [vmem:[%s6 + $0xe0] sm:$0xf]
    %v1159 = vld [vmem:[%s6 + $0xe4] sm:$0xf]
    %v1160 = vld [vmem:[%s6 + $0xe8] sm:$0xf]
    %v1161 = vld [vmem:[%s6 + $0xec] sm:$0xf]
    %v1162 = vld [vmem:[%s6 + $0xf0] sm:$0xf]
    %v1163 = vld [vmem:[%s6 + $0xf4] sm:$0xf]
    %v1164 = vld [vmem:[%s6 + $0xf8] sm:$0xf]
    %v1165 = vld [vmem:[%s6 + $0xfc] sm:$0xf]
    %v1166 = vld [vmem:[%s6 + $0x100] sm:$0xf]
    %v1167 = vld [vmem:[%s6 + $0x104] sm:$0xf]
    %v1168 = vld [vmem:[%s6 + $0x108] sm:$0xf]
    %v1169 = vld [vmem:[%s6 + $0x10c] sm:$0xf]
    %v1170 = vld [vmem:[%s6 + $0x110] sm:$0xf]
    %v1171 = vld [vmem:[%s6 + $0x114] sm:$0xf]
    %v1172 = vld [vmem:[%s6 + $0x118] sm:$0xf]
    %v1173 = vld [vmem:[%s6 + $0x11c] sm:$0xf]
    %v1174 = vld [vmem:[%s6 + $0x120] sm:$0xf]
    %v1175 = vld [vmem:[%s6 + $0x124] sm:$0xf]
    %v1176 = vld [vmem:[%s6 + $0x128] sm:$0xf]
    %v1177 = vld [vmem:[%s6 + $0x12c] sm:$0xf]
    %v1178 = vld [vmem:[%s6 + $0x130] sm:$0xf]
    %v1179 = vld [vmem:[%s6 + $0x134] sm:$0xf]
    %v1180 = vld [vmem:[%s6 + $0x138] sm:$0xf]
    %v1181 = vld [vmem:[%s6 + $0x13c] sm:$0xf]
    %v1182 = vld [vmem:[%s6 + $0x140] sm:$0xf]
    %v1183 = vld [vmem:[%s6 + $0x144] sm:$0xf]
    %v1184 = vld [vmem:[%s6 + $0x148] sm:$0xf]
    %v1185 = vld [vmem:[%s6 + $0x14c] sm:$0xf]
    %v1186 = vld [vmem:[%s6 + $0x150] sm:$0xf]
    %v1187 = vld [vmem:[%s6 + $0x154] sm:$0xf]
    %v1188 = vld [vmem:[%s6 + $0x158] sm:$0xf]
    %v1189 = vld [vmem:[%s6 + $0x15c] sm:$0xf]
    %v1190 = vld [vmem:[%s6 + $0x160] sm:$0xf]
    %v1191 = vld [vmem:[%s6 + $0x164] sm:$0xf]
    %v1192 = vld [vmem:[%s6 + $0x168] sm:$0xf]
    %v1193 = vld [vmem:[%s6 + $0x16c] sm:$0xf]
    %v1194 = vld [vmem:[%s6 + $0x170] sm:$0xf]
    %v1195 = vld [vmem:[%s6 + $0x174] sm:$0xf]
    %v1196 = vld [vmem:[%s6 + $0x178] sm:$0xf]
    %v1197 = vld [vmem:[%s6 + $0x17c] sm:$0xf]
    %v1198 = vld [vmem:[%s6 + $0x180] sm:$0xf]
    %v1199 = vld [vmem:[%s6 + $0x184] sm:$0xf]
    %v1200 = vld [vmem:[%s6 + $0x188] sm:$0xf]
    %v1201 = vld [vmem:[%s6 + $0x18c] sm:$0xf]
    %v1202 = vld [vmem:[%s6 + $0x190] sm:$0xf]
    %v1203 = vld [vmem:[%s6 + $0x194] sm:$0xf]
    %v1204 = vld [vmem:[%s6 + $0x198] sm:$0xf]
    %v1205 = vld [vmem:[%s6 + $0x19c] sm:$0xf]
    %v1206 = vld [vmem:[%s6 + $0x1a0] sm:$0xf]
    %v1207 = vld [vmem:[%s6 + $0x1a4] sm:$0xf]
    %v1208 = vld [vmem:[%s6 + $0x1a8] sm:$0xf]
    %v1209 = vld [vmem:[%s6 + $0x1ac] sm:$0xf]
    %v1210 = vld [vmem:[%s6 + $0x1b0] sm:$0xf]
    %v1211 = vld [vmem:[%s6 + $0x1b4] sm:$0xf]
    %v1212 = vld [vmem:[%s6 + $0x1b8] sm:$0xf]
    %v1213 = vld [vmem:[%s6 + $0x1bc] sm:$0xf]
    %v1214 = vld [vmem:[%s6 + $0x1c0] sm:$0xf]
    %v1215 = vld [vmem:[%s6 + $0x1c4] sm:$0xf]
    %v1216 = vld [vmem:[%s6 + $0x1c8] sm:$0xf]
    %v1217 = vld [vmem:[%s6 + $0x1cc] sm:$0xf]
    %v1218 = vld [vmem:[%s6 + $0x1d0] sm:$0xf]
    %v1219 = vld [vmem:[%s6 + $0x1d4] sm:$0xf]
    %v1220 = vld [vmem:[%s6 + $0x1d8] sm:$0xf]
    %v1221 = vld [vmem:[%s6 + $0x1dc] sm:$0xf]
    %v1222 = vld [vmem:[%s6 + $0x1e0] sm:$0xf]
    %v1223 = vld [vmem:[%s6 + $0x1e4] sm:$0xf]
    %v1224 = vld [vmem:[%s6 + $0x1e8] sm:$0xf]
    %v1225 = vld [vmem:[%s6 + $0x1ec] sm:$0xf]
    %v1226 = vld [vmem:[%s6 + $0x1f0] sm:$0xf]
    %v1227 = vld [vmem:[%s6 + $0x1f4] sm:$0xf]
    %v1228 = vld [vmem:[%s6 + $0x1f8] sm:$0xf]
    %v1229 = vld [vmem:[%s6 + $0x1fc] sm:$0xf]
    %v1230 = vld [vmem:[%s7] sm:$0x1]
    %v1232 = vperm.slane %v1230, 0
    %1234 = vst [vmem:[#allocation1] ss:$9 sm:$0xff] %v48
    %v1235 = vld [vmem:[#allocation1] sm:$0xff]
    %v1236 = vld [vmem:[#allocation1 + $0x9] sm:$0xff]
    %v1237 = vld [vmem:[#allocation1 + $0x12] sm:$0xff]
    %v1238 = vld [vmem:[#allocation1 + $0x1b] sm:$0xff]
    %v1239 = vld [vmem:[#allocation1 + $0x24] sm:$0xff]
    %v1240 = vld [vmem:[#allocation1 + $0x2d] sm:$0xff]
    %v1241 = vld [vmem:[#allocation1 + $0x36] sm:$0xff]
    %v1242 = vld [vmem:[#allocation1 + $0x3f] sm:$0xff]
    %v1379 = vunpack.c.l.b16 %v1102
    %v1380 = vunpack.c.l.b16 %v1103
    %v1381 = vunpack.c.l.b16 %v1104
    %v1382 = vunpack.c.l.b16 %v1105
    %v1383 = vunpack.c.l.b16 %v1106
    %v1384 = vunpack.c.l.b16 %v1107
    %v1385 = vunpack.c.l.b16 %v1108
    %v1386 = vunpack.c.l.b16 %v1109
    %v1387 = vunpack.c.l.b16 %v1110
    %v1388 = vunpack.c.l.b16 %v1111
    %v1389 = vunpack.c.l.b16 %v1112
    %v1390 = vunpack.c.l.b16 %v1113
    %v1391 = vunpack.c.l.b16 %v1114
    %v1392 = vunpack.c.l.b16 %v1115
    %v1393 = vunpack.c.l.b16 %v1116
    %v1394 = vunpack.c.l.b16 %v1117
    %v1395 = vunpack.c.l.b16 %v1118
    %v1396 = vunpack.c.l.b16 %v1119
    %v1397 = vunpack.c.l.b16 %v1120
    %v1398 = vunpack.c.l.b16 %v1121
    %v1399 = vunpack.c.l.b16 %v1122
    %v1400 = vunpack.c.l.b16 %v1123
    %v1401 = vunpack.c.l.b16 %v1124
    %v1402 = vunpack.c.l.b16 %v1125
    %v1403 = vunpack.c.l.b16 %v1126
    %v1404 = vunpack.c.l.b16 %v1127
    %v1405 = vunpack.c.l.b16 %v1128
    %v1406 = vunpack.c.l.b16 %v1129
    %v1407 = vunpack.c.l.b16 %v1130
    %v1408 = vunpack.c.l.b16 %v1131
    %v1409 = vunpack.c.l.b16 %v1132
    %v1410 = vunpack.c.l.b16 %v1133
    %v1411 = vunpack.c.l.b16 %v1134
    %v1412 = vunpack.c.l.b16 %v1135
    %v1413 = vunpack.c.l.b16 %v1136
    %v1414 = vunpack.c.l.b16 %v1137
    %v1415 = vunpack.c.l.b16 %v1138
    %v1416 = vunpack.c.l.b16 %v1139
    %v1417 = vunpack.c.l.b16 %v1140
    %v1418 = vunpack.c.l.b16 %v1141
    %v1419 = vunpack.c.l.b16 %v1142
    %v1420 = vunpack.c.l.b16 %v1143
    %v1421 = vunpack.c.l.b16 %v1144
    %v1422 = vunpack.c.l.b16 %v1145
    %v1423 = vunpack.c.l.b16 %v1146
    %v1424 = vunpack.c.l.b16 %v1147
    %v1425 = vunpack.c.l.b16 %v1148
    %v1426 = vunpack.c.l.b16 %v1149
    %v1427 = vunpack.c.l.b16 %v1150
    %v1428 = vunpack.c.l.b16 %v1151
    %v1429 = vunpack.c.l.b16 %v1152
    %v1430 = vunpack.c.l.b16 %v1153
    %v1431 = vunpack.c.l.b16 %v1154
    %v1432 = vunpack.c.l.b16 %v1155
    %v1433 = vunpack.c.l.b16 %v1156
    %v1434 = vunpack.c.l.b16 %v1157
    %v1435 = vunpack.c.l.b16 %v1158
    %v1436 = vunpack.c.l.b16 %v1159
    %v1437 = vunpack.c.l.b16 %v1160
    %v1438 = vunpack.c.l.b16 %v1161
    %v1439 = vunpack.c.l.b16 %v1162
    %v1440 = vunpack.c.l.b16 %v1163
    %v1441 = vunpack.c.l.b16 %v1164
    %v1442 = vunpack.c.l.b16 %v1165
    %v1443 = vunpack.c.l.b16 %v1166
    %v1444 = vunpack.c.l.b16 %v1167
    %v1445 = vunpack.c.l.b16 %v1168
    %v1446 = vunpack.c.l.b16 %v1169
    %v1447 = vunpack.c.l.b16 %v1170
    %v1448 = vunpack.c.l.b16 %v1171
    %v1449 = vunpack.c.l.b16 %v1172
    %v1450 = vunpack.c.l.b16 %v1173
    %v1451 = vunpack.c.l.b16 %v1174
    %v1452 = vunpack.c.l.b16 %v1175
    %v1453 = vunpack.c.l.b16 %v1176
    %v1454 = vunpack.c.l.b16 %v1177
    %v1455 = vunpack.c.l.b16 %v1178
    %v1456 = vunpack.c.l.b16 %v1179
    %v1457 = vunpack.c.l.b16 %v1180
    %v1458 = vunpack.c.l.b16 %v1181
    %v1459 = vunpack.c.l.b16 %v1182
    %v1460 = vunpack.c.l.b16 %v1183
    %v1461 = vunpack.c.l.b16 %v1184
    %v1462 = vunpack.c.l.b16 %v1185
    %v1463 = vunpack.c.l.b16 %v1186
    %v1464 = vunpack.c.l.b16 %v1187
    %v1465 = vunpack.c.l.b16 %v1188
    %v1466 = vunpack.c.l.b16 %v1189
    %v1467 = vunpack.c.l.b16 %v1190
    %v1468 = vunpack.c.l.b16 %v1191
    %v1469 = vunpack.c.l.b16 %v1192
    %v1470 = vunpack.c.l.b16 %v1193
    %v1471 = vunpack.c.l.b16 %v1194
    %v1472 = vunpack.c.l.b16 %v1195
    %v1473 = vunpack.c.l.b16 %v1196
    %v1474 = vunpack.c.l.b16 %v1197
    %v1475 = vunpack.c.l.b16 %v1198
    %v1476 = vunpack.c.l.b16 %v1199
    %v1477 = vunpack.c.l.b16 %v1200
    %v1478 = vunpack.c.l.b16 %v1201
    %v1479 = vunpack.c.l.b16 %v1202
    %v1480 = vunpack.c.l.b16 %v1203
    %v1481 = vunpack.c.l.b16 %v1204
    %v1482 = vunpack.c.l.b16 %v1205
    %v1483 = vunpack.c.l.b16 %v1206
    %v1484 = vunpack.c.l.b16 %v1207
    %v1485 = vunpack.c.l.b16 %v1208
    %v1486 = vunpack.c.l.b16 %v1209
    %v1487 = vunpack.c.l.b16 %v1210
    %v1488 = vunpack.c.l.b16 %v1211
    %v1489 = vunpack.c.l.b16 %v1212
    %v1490 = vunpack.c.l.b16 %v1213
    %v1491 = vunpack.c.l.b16 %v1214
    %v1492 = vunpack.c.l.b16 %v1215
    %v1493 = vunpack.c.l.b16 %v1216
    %v1494 = vunpack.c.l.b16 %v1217
    %v1495 = vunpack.c.l.b16 %v1218
    %v1496 = vunpack.c.l.b16 %v1219
    %v1497 = vunpack.c.l.b16 %v1220
    %v1498 = vunpack.c.l.b16 %v1221
    %v1499 = vunpack.c.l.b16 %v1222
    %v1500 = vunpack.c.l.b16 %v1223
    %v1501 = vunpack.c.l.b16 %v1224
    %v1502 = vunpack.c.l.b16 %v1225
    %v1503 = vunpack.c.l.b16 %v1226
    %v1504 = vunpack.c.l.b16 %v1227
    %v1505 = vunpack.c.l.b16 %v1228
    %v1506 = vunpack.c.l.b16 %v1229
    %v1507 = vpack.c.b16 %v1380, %v1379
    %v1508 = vpack.c.b16 %v1382, %v1381
    %v1509 = vpack.c.b16 %v1384, %v1383
    %v1510 = vpack.c.b16 %v1386, %v1385
    %v1511 = vpack.c.b16 %v1388, %v1387
    %v1512 = vpack.c.b16 %v1390, %v1389
    %v1513 = vpack.c.b16 %v1392, %v1391
    %v1514 = vpack.c.b16 %v1394, %v1393
    %v1515 = vpack.c.b16 %v1396, %v1395
    %v1516 = vpack.c.b16 %v1398, %v1397
    %v1517 = vpack.c.b16 %v1400, %v1399
    %v1518 = vpack.c.b16 %v1402, %v1401
    %v1519 = vpack.c.b16 %v1404, %v1403
    %v1520 = vpack.c.b16 %v1406, %v1405
    %v1521 = vpack.c.b16 %v1408, %v1407
    %v1522 = vpack.c.b16 %v1410, %v1409
    %v1523 = vpack.c.b16 %v1412, %v1411
    %v1524 = vpack.c.b16 %v1414, %v1413
    %v1525 = vpack.c.b16 %v1416, %v1415
    %v1526 = vpack.c.b16 %v1418, %v1417
    %v1527 = vpack.c.b16 %v1420, %v1419
    %v1528 = vpack.c.b16 %v1422, %v1421
    %v1529 = vpack.c.b16 %v1424, %v1423
    %v1530 = vpack.c.b16 %v1426, %v1425
    %v1531 = vpack.c.b16 %v1428, %v1427
    %v1532 = vpack.c.b16 %v1430, %v1429
    %v1533 = vpack.c.b16 %v1432, %v1431
    %v1534 = vpack.c.b16 %v1434, %v1433
    %v1535 = vpack.c.b16 %v1436, %v1435
    %v1536 = vpack.c.b16 %v1438, %v1437
    %v1537 = vpack.c.b16 %v1440, %v1439
    %v1538 = vpack.c.b16 %v1442, %v1441
    %v1539 = vpack.c.b16 %v1444, %v1443
    %v1540 = vpack.c.b16 %v1446, %v1445
    %v1541 = vpack.c.b16 %v1448, %v1447
    %v1542 = vpack.c.b16 %v1450, %v1449
    %v1543 = vpack.c.b16 %v1452, %v1451
    %v1544 = vpack.c.b16 %v1454, %v1453
    %v1545 = vpack.c.b16 %v1456, %v1455
    %v1546 = vpack.c.b16 %v1458, %v1457
    %v1547 = vpack.c.b16 %v1460, %v1459
    %v1548 = vpack.c.b16 %v1462, %v1461
    %v1549 = vpack.c.b16 %v1464, %v1463
    %v1550 = vpack.c.b16 %v1466, %v1465
    %v1551 = vpack.c.b16 %v1468, %v1467
    %v1552 = vpack.c.b16 %v1470, %v1469
    %v1553 = vpack.c.b16 %v1472, %v1471
    %v1554 = vpack.c.b16 %v1474, %v1473
    %v1555 = vpack.c.b16 %v1476, %v1475
    %v1556 = vpack.c.b16 %v1478, %v1477
    %v1557 = vpack.c.b16 %v1480, %v1479
    %v1558 = vpack.c.b16 %v1482, %v1481
    %v1559 = vpack.c.b16 %v1484, %v1483
    %v1560 = vpack.c.b16 %v1486, %v1485
    %v1561 = vpack.c.b16 %v1488, %v1487
    %v1562 = vpack.c.b16 %v1490, %v1489
    %v1563 = vpack.c.b16 %v1492, %v1491
    %v1564 = vpack.c.b16 %v1494, %v1493
    %v1565 = vpack.c.b16 %v1496, %v1495
    %v1566 = vpack.c.b16 %v1498, %v1497
    %v1567 = vpack.c.b16 %v1500, %v1499
    %v1568 = vpack.c.b16 %v1502, %v1501
    %v1569 = vpack.c.b16 %v1504, %v1503
    %v1570 = vpack.c.b16 %v1506, %v1505
    %1635 = vmatpush.bf16.msra.mxu0 %v1514
    %1636 = vmatpush.bf16.msra.mxu0 %v1513
    %1637 = vmatpush.bf16.msra.mxu0 %v1512
    %1638 = vmatpush.bf16.msra.mxu0 %v1511
    %1639 = vmatpush.bf16.msra.mxu0 %v1510
    %1640 = vmatpush.bf16.msra.mxu0 %v1509
    %1641 = vmatpush.bf16.msra.mxu0 %v1508
    %1642 = vmatpush.bf16.msra.mxu0 %v1507
    %1643 = vmatmul.bf16.gmra.mxu0 %v1235
    %v1644 = vpop.f32.mrf.mxu0
    %v1645 = vadd.f32 %v1232, %v1644
    %v1646 = vpop.f32.mrf.mxu0
    %1647 = vdwg.mxu0
    %1648 = vmatpush.bf16.msra.mxu0 %v1522
    %1649 = vmatpush.bf16.msra.mxu0 %v1521
    %1650 = vmatpush.bf16.msra.mxu0 %v1520
    %1651 = vmatpush.bf16.msra.mxu0 %v1519
    %1652 = vmatpush.bf16.msra.mxu0 %v1518
    %1653 = vmatpush.bf16.msra.mxu0 %v1517
    %1654 = vmatpush.bf16.msra.mxu0 %v1516
    %1655 = vmatpush.bf16.msra.mxu0 %v1515
    %1656 = vmatmul.bf16.gmra.mxu0 %v1236
    %v1657 = vpop.f32.mrf.mxu0
    %v1658 = vadd.f32 %v1645, %v1657
    %v1659 = vpop.f32.mrf.mxu0
    %1660 = vdwg.mxu0
    %1661 = vmatpush.bf16.msra.mxu0 %v1530
    %1662 = vmatpush.bf16.msra.mxu0 %v1529
    %1663 = vmatpush.bf16.msra.mxu0 %v1528
    %1664 = vmatpush.bf16.msra.mxu0 %v1527
    %1665 = vmatpush.bf16.msra.mxu0 %v1526
    %1666 = vmatpush.bf16.msra.mxu0 %v1525
    %1667 = vmatpush.bf16.msra.mxu0 %v1524
    %1668 = vmatpush.bf16.msra.mxu0 %v1523
    %1669 = vmatmul.bf16.gmra.mxu0 %v1237
    %v1670 = vpop.f32.mrf.mxu0
    %v1671 = vadd.f32 %v1658, %v1670
    %v1672 = vpop.f32.mrf.mxu0
    %1673 = vdwg.mxu0
    %1674 = vmatpush.bf16.msra.mxu0 %v1538
    %1675 = vmatpush.bf16.msra.mxu0 %v1537
    %1676 = vmatpush.bf16.msra.mxu0 %v1536
    %1677 = vmatpush.bf16.msra.mxu0 %v1535
    %1678 = vmatpush.bf16.msra.mxu0 %v1534
    %1679 = vmatpush.bf16.msra.mxu0 %v1533
    %1680 = vmatpush.bf16.msra.mxu0 %v1532
    %1681 = vmatpush.bf16.msra.mxu0 %v1531
    %1682 = vmatmul.bf16.gmra.mxu0 %v1238
    %v1683 = vpop.f32.mrf.mxu0
    %v1684 = vadd.f32 %v1671, %v1683
    %v1685 = vpop.f32.mrf.mxu0
    %1686 = vdwg.mxu0
    %1687 = vmatpush.bf16.msra.mxu0 %v1546
    %1688 = vmatpush.bf16.msra.mxu0 %v1545
    %1689 = vmatpush.bf16.msra.mxu0 %v1544
    %1690 = vmatpush.bf16.msra.mxu0 %v1543
    %1691 = vmatpush.bf16.msra.mxu0 %v1542
    %1692 = vmatpush.bf16.msra.mxu0 %v1541
    %1693 = vmatpush.bf16.msra.mxu0 %v1540
    %1694 = vmatpush.bf16.msra.mxu0 %v1539
    %1695 = vmatmul.bf16.gmra.mxu0 %v1239
    %v1696 = vpop.f32.mrf.mxu0
    %v1697 = vadd.f32 %v1684, %v1696
    %v1698 = vpop.f32.mrf.mxu0
    %1699 = vdwg.mxu0
    %1700 = vmatpush.bf16.msra.mxu0 %v1554
    %1701 = vmatpush.bf16.msra.mxu0 %v1553
    %1702 = vmatpush.bf16.msra.mxu0 %v1552
    %1703 = vmatpush.bf16.msra.mxu0 %v1551
    %1704 = vmatpush.bf16.msra.mxu0 %v1550
    %1705 = vmatpush.bf16.msra.mxu0 %v1549
    %1706 = vmatpush.bf16.msra.mxu0 %v1548
    %1707 = vmatpush.bf16.msra.mxu0 %v1547
    %1708 = vmatmul.bf16.gmra.mxu0 %v1240
    %v1709 = vpop.f32.mrf.mxu0
    %v1710 = vadd.f32 %v1697, %v1709
    %v1711 = vpop.f32.mrf.mxu0
    %1712 = vdwg.mxu0
    %1713 = vmatpush.bf16.msra.mxu0 %v1562
    %1714 = vmatpush.bf16.msra.mxu0 %v1561
    %1715 = vmatpush.bf16.msra.mxu0 %v1560
    %1716 = vmatpush.bf16.msra.mxu0 %v1559
    %1717 = vmatpush.bf16.msra.mxu0 %v1558
    %1718 = vmatpush.bf16.msra.mxu0 %v1557
    %1719 = vmatpush.bf16.msra.mxu0 %v1556
    %1720 = vmatpush.bf16.msra.mxu0 %v1555
    %1721 = vmatmul.bf16.gmra.mxu0 %v1241
    %v1722 = vpop.f32.mrf.mxu0
    %v1723 = vadd.f32 %v1710, %v1722
    %v1724 = vpop.f32.mrf.mxu0
    %1725 = vdwg.mxu0
    %1726 = vmatpush.bf16.msra.mxu0 %v1570
    %1727 = vmatpush.bf16.msra.mxu0 %v1569
    %1728 = vmatpush.bf16.msra.mxu0 %v1568
    %1729 = vmatpush.bf16.msra.mxu0 %v1567
    %1730 = vmatpush.bf16.msra.mxu0 %v1566
    %1731 = vmatpush.bf16.msra.mxu0 %v1565
    %1732 = vmatpush.bf16.msra.mxu0 %v1564
    %1733 = vmatpush.bf16.msra.mxu0 %v1563
    %1734 = vmatmul.bf16.gmra.mxu0 %v1242
    %v1735 = vpop.f32.mrf.mxu0
    %v1736 = vadd.f32 %v1723, %v1735
    %v1737 = vpop.f32.mrf.mxu0
    %1738 = vdwg.mxu0
    %v1739 = vmax.f32 %v1736, 0.0
    %v1740 = vpack.c.bf16 %v1739, %v1739
    %v1741 = vld [vmem:[%s8] sm:$0xf]
    %v1742 = vld [vmem:[%s8 + $0x4] sm:$0xf]
    %v1743 = vld [vmem:[%s8 + $0x8] sm:$0xf]
    %v1744 = vld [vmem:[%s8 + $0xc] sm:$0xf]
    %v1745 = vld [vmem:[%s8 + $0x10] sm:$0xf]
    %v1746 = vld [vmem:[%s8 + $0x14] sm:$0xf]
    %v1747 = vld [vmem:[%s8 + $0x18] sm:$0xf]
    %v1748 = vld [vmem:[%s8 + $0x1c] sm:$0xf]
    %v1749 = vld [vmem:[%s8 + $0x20] sm:$0xf]
    %v1750 = vld [vmem:[%s8 + $0x24] sm:$0xf]
    %v1751 = vld [vmem:[%s8 + $0x28] sm:$0xf]
    %v1752 = vld [vmem:[%s8 + $0x2c] sm:$0xf]
    %v1753 = vld [vmem:[%s8 + $0x30] sm:$0xf]
    %v1754 = vld [vmem:[%s8 + $0x34] sm:$0xf]
    %v1755 = vld [vmem:[%s8 + $0x38] sm:$0xf]
    %v1756 = vld [vmem:[%s8 + $0x3c] sm:$0xf]
    %v1757 = vld [vmem:[%s9] sm:$0x1]
    %v1759 = vperm.slane %v1757, 0
    %v1777 = vunpack.c.l.b16 %v1741
    %v1778 = vunpack.c.l.b16 %v1742
    %v1779 = vunpack.c.l.b16 %v1743
    %v1780 = vunpack.c.l.b16 %v1744
    %v1781 = vunpack.c.l.b16 %v1745
    %v1782 = vunpack.c.l.b16 %v1746
    %v1783 = vunpack.c.l.b16 %v1747
    %v1784 = vunpack.c.l.b16 %v1748
    %v1785 = vunpack.c.l.b16 %v1749
    %v1786 = vunpack.c.l.b16 %v1750
    %v1787 = vunpack.c.l.b16 %v1751
    %v1788 = vunpack.c.l.b16 %v1752
    %v1789 = vunpack.c.l.b16 %v1753
    %v1790 = vunpack.c.l.b16 %v1754
    %v1791 = vunpack.c.l.b16 %v1755
    %v1792 = vunpack.c.l.b16 %v1756
    %v1793 = vpack.c.b16 %v1778, %v1777
    %v1794 = vpack.c.b16 %v1780, %v1779
    %v1795 = vpack.c.b16 %v1782, %v1781
    %v1796 = vpack.c.b16 %v1784, %v1783
    %v1797 = vpack.c.b16 %v1786, %v1785
    %v1798 = vpack.c.b16 %v1788, %v1787
    %v1799 = vpack.c.b16 %v1790, %v1789
    %v1800 = vpack.c.b16 %v1792, %v1791
    %1809 = vmatpush.bf16.msra.mxu0 %v1800
    %1810 = vmatpush.bf16.msra.mxu0 %v1799
    %1811 = vmatpush.bf16.msra.mxu0 %v1798
    %1812 = vmatpush.bf16.msra.mxu0 %v1797
    %1813 = vmatpush.bf16.msra.mxu0 %v1796
    %1814 = vmatpush.bf16.msra.mxu0 %v1795
    %1815 = vmatpush.bf16.msra.mxu0 %v1794
    %1816 = vmatpush.bf16.msra.mxu0 %v1793
    %1817 = vmatmul.bf16.gmra.mxu0 %v1740
    %v1818 = vpop.f32.mrf.mxu0
    %v1819 = vadd.f32 %v1759, %v1818
    %v1820 = vpop.f32.mrf.mxu0
    %1821 = vdwg.mxu0
    %1822 = vst [vmem:[#allocation1] ss:$9 sm:$0xff] %v49
    %v1823 = vld [vmem:[#allocation1] sm:$0xff]
    %v1824 = vld [vmem:[#allocation1 + $0x9] sm:$0xff]
    %v1825 = vld [vmem:[#allocation1 + $0x12] sm:$0xff]
    %v1826 = vld [vmem:[#allocation1 + $0x1b] sm:$0xff]
    %v1827 = vld [vmem:[#allocation1 + $0x24] sm:$0xff]
    %v1828 = vld [vmem:[#allocation1 + $0x2d] sm:$0xff]
    %v1829 = vld [vmem:[#allocation1 + $0x36] sm:$0xff]
    %v1830 = vld [vmem:[#allocation1 + $0x3f] sm:$0xff]
    %1839 = vmatpush.bf16.msra.mxu0 %v1514
    %1840 = vmatpush.bf16.msra.mxu0 %v1513
    %1841 = vmatpush.bf16.msra.mxu0 %v1512
    %1842 = vmatpush.bf16.msra.mxu0 %v1511
    %1843 = vmatpush.bf16.msra.mxu0 %v1510
    %1844 = vmatpush.bf16.msra.mxu0 %v1509
    %1845 = vmatpush.bf16.msra.mxu0 %v1508
    %1846 = vmatpush.bf16.msra.mxu0 %v1507
    %1847 = vmatmul.bf16.gmra.mxu0 %v1823
    %v1848 = vpop.f32.mrf.mxu0
    %v1849 = vadd.f32 %v1232, %v1848
    %v1850 = vpop.f32.mrf.mxu0
    %1851 = vdwg.mxu0
    %1852 = vmatpush.bf16.msra.mxu0 %v1522
    %1853 = vmatpush.bf16.msra.mxu0 %v1521
    %1854 = vmatpush.bf16.msra.mxu0 %v1520
    %1855 = vmatpush.bf16.msra.mxu0 %v1519
    %1856 = vmatpush.bf16.msra.mxu0 %v1518
    %1857 = vmatpush.bf16.msra.mxu0 %v1517
    %1858 = vmatpush.bf16.msra.mxu0 %v1516
    %1859 = vmatpush.bf16.msra.mxu0 %v1515
    %1860 = vmatmul.bf16.gmra.mxu0 %v1824
    %v1861 = vpop.f32.mrf.mxu0
    %v1862 = vadd.f32 %v1849, %v1861
    %v1863 = vpop.f32.mrf.mxu0
    %1864 = vdwg.mxu0
    %1865 = vmatpush.bf16.msra.mxu0 %v1530
    %1866 = vmatpush.bf16.msra.mxu0 %v1529
    %1867 = vmatpush.bf16.msra.mxu0 %v1528
    %1868 = vmatpush.bf16.msra.mxu0 %v1527
    %1869 = vmatpush.bf16.msra.mxu0 %v1526
    %1870 = vmatpush.bf16.msra.mxu0 %v1525
    %1871 = vmatpush.bf16.msra.mxu0 %v1524
    %1872 = vmatpush.bf16.msra.mxu0 %v1523
    %1873 = vmatmul.bf16.gmra.mxu0 %v1825
    %v1874 = vpop.f32.mrf.mxu0
    %v1875 = vadd.f32 %v1862, %v1874
    %v1876 = vpop.f32.mrf.mxu0
    %1877 = vdwg.mxu0
    %1878 = vmatpush.bf16.msra.mxu0 %v1538
    %1879 = vmatpush.bf16.msra.mxu0 %v1537
    %1880 = vmatpush.bf16.msra.mxu0 %v1536
    %1881 = vmatpush.bf16.msra.mxu0 %v1535
    %1882 = vmatpush.bf16.msra.mxu0 %v1534
    %1883 = vmatpush.bf16.msra.mxu0 %v1533
    %1884 = vmatpush.bf16.msra.mxu0 %v1532
    %1885 = vmatpush.bf16.msra.mxu0 %v1531
    %1886 = vmatmul.bf16.gmra.mxu0 %v1826
    %v1887 = vpop.f32.mrf.mxu0
    %v1888 = vadd.f32 %v1875, %v1887
    %v1889 = vpop.f32.mrf.mxu0
    %1890 = vdwg.mxu0
    %1891 = vmatpush.bf16.msra.mxu0 %v1546
    %1892 = vmatpush.bf16.msra.mxu0 %v1545
    %1893 = vmatpush.bf16.msra.mxu0 %v1544
    %1894 = vmatpush.bf16.msra.mxu0 %v1543
    %1895 = vmatpush.bf16.msra.mxu0 %v1542
    %1896 = vmatpush.bf16.msra.mxu0 %v1541
    %1897 = vmatpush.bf16.msra.mxu0 %v1540
    %1898 = vmatpush.bf16.msra.mxu0 %v1539
    %1899 = vmatmul.bf16.gmra.mxu0 %v1827
    %v1900 = vpop.f32.mrf.mxu0
    %v1901 = vadd.f32 %v1888, %v1900
    %v1902 = vpop.f32.mrf.mxu0
    %1903 = vdwg.mxu0
    %1904 = vmatpush.bf16.msra.mxu0 %v1554
    %1905 = vmatpush.bf16.msra.mxu0 %v1553
    %1906 = vmatpush.bf16.msra.mxu0 %v1552
    %1907 = vmatpush.bf16.msra.mxu0 %v1551
    %1908 = vmatpush.bf16.msra.mxu0 %v1550
    %1909 = vmatpush.bf16.msra.mxu0 %v1549
    %1910 = vmatpush.bf16.msra.mxu0 %v1548
    %1911 = vmatpush.bf16.msra.mxu0 %v1547
    %1912 = vmatmul.bf16.gmra.mxu0 %v1828
    %v1913 = vpop.f32.mrf.mxu0
    %v1914 = vadd.f32 %v1901, %v1913
    %v1915 = vpop.f32.mrf.mxu0
    %1916 = vdwg.mxu0
    %1917 = vmatpush.bf16.msra.mxu0 %v1562
    %1918 = vmatpush.bf16.msra.mxu0 %v1561
    %1919 = vmatpush.bf16.msra.mxu0 %v1560
    %1920 = vmatpush.bf16.msra.mxu0 %v1559
    %1921 = vmatpush.bf16.msra.mxu0 %v1558
    %1922 = vmatpush.bf16.msra.mxu0 %v1557
    %1923 = vmatpush.bf16.msra.mxu0 %v1556
    %1924 = vmatpush.bf16.msra.mxu0 %v1555
    %1925 = vmatmul.bf16.gmra.mxu0 %v1829
    %v1926 = vpop.f32.mrf.mxu0
    %v1927 = vadd.f32 %v1914, %v1926
    %v1928 = vpop.f32.mrf.mxu0
    %1929 = vdwg.mxu0
    %1930 = vmatpush.bf16.msra.mxu0 %v1570
    %1931 = vmatpush.bf16.msra.mxu0 %v1569
    %1932 = vmatpush.bf16.msra.mxu0 %v1568
    %1933 = vmatpush.bf16.msra.mxu0 %v1567
    %1934 = vmatpush.bf16.msra.mxu0 %v1566
    %1935 = vmatpush.bf16.msra.mxu0 %v1565
    %1936 = vmatpush.bf16.msra.mxu0 %v1564
    %1937 = vmatpush.bf16.msra.mxu0 %v1563
    %1938 = vmatmul.bf16.gmra.mxu0 %v1830
    %v1939 = vpop.f32.mrf.mxu0
    %v1940 = vadd.f32 %v1927, %v1939
    %v1941 = vpop.f32.mrf.mxu0
    %1942 = vdwg.mxu0
    %v1943 = vmax.f32 %v1940, 0.0
    %v1944 = vpack.c.bf16 %v1943, %v1943
    %1945 = vmatpush.bf16.msra.mxu0 %v1800
    %1946 = vmatpush.bf16.msra.mxu0 %v1799
    %1947 = vmatpush.bf16.msra.mxu0 %v1798
    %1948 = vmatpush.bf16.msra.mxu0 %v1797
    %1949 = vmatpush.bf16.msra.mxu0 %v1796
    %1950 = vmatpush.bf16.msra.mxu0 %v1795
    %1951 = vmatpush.bf16.msra.mxu0 %v1794
    %1952 = vmatpush.bf16.msra.mxu0 %v1793
    %1953 = vmatmul.bf16.gmra.mxu0 %v1944
    %v1954 = vpop.f32.mrf.mxu0
    %v1955 = vadd.f32 %v1759, %v1954
    %v1956 = vpop.f32.mrf.mxu0
    %1957 = vdwg.mxu0
    %v1958 = vmul.f32 %v1070, %v1955
    %vm1959 = vcmask 1041408
    %v1960 = vsel %vm1959, %v1958, 0.0
    %1961 = vadd.xlane.f32.xlu0 %v1960
    %v1962 = vpop.xlane.xlu0 %1961
    %v1963 = vmul.f32 %v1070, %v1070
    %v1964 = vsel %vm1959, %v1963, 0.0
    %1965 = vadd.xlane.f32.xlu0 %v1964
    %v1966 = vpop.xlane.xlu0 %1965
    %v1967 = vmul.f32 %v1955, %v1955
    %v1968 = vsel %vm1959, %v1967, 0.0
    %1969 = vadd.xlane.f32.xlu0 %v1968
    %v1970 = vpop.xlane.xlu0 %1969
    %v1971 = vmax.f32 %v1966, 1e-24
    %v1972 = vrsqrt.pop %v1971
    %v1973 = vmul.f32 %v1972, %v1971
    %v1974 = vmul.f32 %v1973, %v1972
    %v1975 = vmul.f32 0.5, %v1974
    %v1976 = vsub.f32 1.5, %v1975
    %v1977 = vmul.f32 %v1972, %v1976
    %vm1978 = vweird.f32 %v1971
    %vm1979 = vweird.f32 %v1972
    %vm1980 = vmor %vm1978, %vm1979
    %v1981 = vsel %vm1980, %v1972, %v1977
    %v1982 = vmul.f32 %v1962, %v1981
    %v1983 = vmax.f32 %v1970, 1e-24
    %v1984 = vrsqrt.pop %v1983
    %v1985 = vmul.f32 %v1984, %v1983
    %v1986 = vmul.f32 %v1985, %v1984
    %v1987 = vmul.f32 0.5, %v1986
    %v1988 = vsub.f32 1.5, %v1987
    %v1989 = vmul.f32 %v1984, %v1988
    %vm1990 = vweird.f32 %v1983
    %vm1991 = vweird.f32 %v1984
    %vm1992 = vmor %vm1990, %vm1991
    %v1993 = vsel %vm1992, %v1984, %v1989
    %v1994 = vmul.f32 %v1982, %v1993
    %vm1995 = vcmask 1024
    %v1996 = vsel %vm1995, %v1994, 0.0
    %1997 = vadd.xlane.f32.xlu0 %v1996
    %v1998 = vpop.xlane.xlu0 %1997
    %v1999 = vrot.slane %v1998, 4
    %v2000 = vadd.f32 %v1998, %v1999
    %v2001 = vrot.slane %v2000, 2
    %v2002 = vadd.f32 %v2000, %v2001
    %v2003 = vrot.slane %v2002, 1
    %v2004 = vadd.f32 %v2002, %v2003
    %s2005 = vtos %v2004
    %v2006 = vmul.f32 %v1099, %v1819
    %v2007 = vsel %vm1959, %v2006, 0.0
    %2008 = vadd.xlane.f32.xlu0 %v2007
    %v2009 = vpop.xlane.xlu0 %2008
    %v2010 = vmul.f32 %v1099, %v1099
    %v2011 = vsel %vm1959, %v2010, 0.0
    %2012 = vadd.xlane.f32.xlu0 %v2011
    %v2013 = vpop.xlane.xlu0 %2012
    %v2014 = vmul.f32 %v1819, %v1819
    %v2015 = vsel %vm1959, %v2014, 0.0
    %2016 = vadd.xlane.f32.xlu0 %v2015
    %v2017 = vpop.xlane.xlu0 %2016
    %v2018 = vmax.f32 %v2013, 1e-24
    %v2019 = vrsqrt.pop %v2018
    %v2020 = vmul.f32 %v2019, %v2018
    %v2021 = vmul.f32 %v2020, %v2019
    %v2022 = vmul.f32 0.5, %v2021
    %v2023 = vsub.f32 1.5, %v2022
    %v2024 = vmul.f32 %v2019, %v2023
    %vm2025 = vweird.f32 %v2018
    %vm2026 = vweird.f32 %v2019
    %vm2027 = vmor %vm2025, %vm2026
    %v2028 = vsel %vm2027, %v2019, %v2024
    %v2029 = vmul.f32 %v2009, %v2028
    %v2030 = vmax.f32 %v2017, 1e-24
    %v2031 = vrsqrt.pop %v2030
    %v2032 = vmul.f32 %v2031, %v2030
    %v2033 = vmul.f32 %v2032, %v2031
    %v2034 = vmul.f32 0.5, %v2033
    %v2035 = vsub.f32 1.5, %v2034
    %v2036 = vmul.f32 %v2031, %v2035
    %vm2037 = vweird.f32 %v2030
    %vm2038 = vweird.f32 %v2031
    %vm2039 = vmor %vm2037, %vm2038
    %v2040 = vsel %vm2039, %v2031, %v2036
    %v2041 = vmul.f32 %v2029, %v2040
    %v2042 = vsel %vm1995, %v2041, 0.0
    %2043 = vadd.xlane.f32.xlu0 %v2042
    %v2044 = vpop.xlane.xlu0 %2043
    %v2045 = vrot.slane %v2044, 4
    %v2046 = vadd.f32 %v2044, %v2045
    %v2047 = vrot.slane %v2046, 2
    %v2048 = vadd.f32 %v2046, %v2047
    %v2049 = vrot.slane %v2048, 1
    %v2050 = vadd.f32 %v2048, %v2049
    %s2051 = vtos %v2050
    %s2052 = sadd.f32 %s2005, %s2051
    %s2053 = ssub.f32 4.0, %s2052
    %v2054 = vstv %s2053
    %vm2055 = vcmask 0
    %2056 = vst.msk [vmem:[#allocation2] sm:$0x1] %vm2055, %v2054
    // Predicated region
    $region58: #{byol_forward.1} parent=1 // pred_check
      _
    $region59: #{byol_forward.1} parent=1 // pred_check_branch
      %2058 = sbr.rel (0) target = $region61
    $region60: #{byol_forward.1} parent=1 // pred_region
      %2060 = vsyncadd [#allocation3], 0
      %s2062 = sshll.u32 [#allocation2], 4
      %s2063 = int_to_ptr.vmem [resolvable:$true] %s2062
      %s2064 = sshll.u32 %s14, 4
      %s2065 = int_to_ptr.hbm [resolvable:$true] %s2064
      %2067 = dma.vmem_to_hbm [thread:$0]  %s2063, 16, %s2065, [#allocation3]
    $region61: #{byol_forward.1} parent=1 // pred_fallthru
      _
    // Predicated region
    $region62: #{byol_forward.1} parent=1 // pred_check
      _
    $region63: #{byol_forward.1} parent=1 // pred_check_branch
      %2069 = sbr.rel (0) target = $region65
    $region64: #{byol_forward.1} parent=1 // pred_region
      %2071 = dma.done [#allocation3], 16
    $region65: #{byol_forward.1} parent=1 // pred_fallthru
      _
    %2072 = vsyncpa [#allocation3], 1

</llo_original>
